<compile_context>
chip_gen: v6e
topology: v6e:2x2x1
jax: 0.10.0
libtpu: 0.0.40
codegen_flags: <defaults>
</compile_context>

<pallas_src>
import functools
import math

import jax
import jax.numpy as jnp
from jax.experimental import pallas as pl
from jax.experimental.pallas import tpu as pltpu


# ----------------------------------------------------------------------------
# Pallas kernel: whole forward pass (LSTM + attention process block + decoder)
# ----------------------------------------------------------------------------
def _critic_kernel(
    x_ref,        # (TB, S, E)  f32   batch-tile of embedded inputs (batch-major)
    h0_ref,       # (1, H)      f32   trainable init hidden
    c0_ref,       # (1, H)      f32   trainable init cell
    w_ih_ref,     # (E, 4H)     bf16  LSTM input weights  (pre-transposed)
    w_hh_ref,     # (H, 4H)     bf16  LSTM hidden weights (pre-transposed)
    b_lstm_ref,   # (1, 4H)     f32   b_ih + b_hh
    wq_ref,       # (H, H)      bf16  project_query weight (pre-transposed)
    bq_ref,       # (1, H)      f32
    wref_ref,     # (H, H)      bf16  project_ref (Conv1d k=1) weight (pre-transposed)
    bref_ref,     # (1, H)      f32
    v_ref,        # (1, H)      f32   attention vector v
    w1_ref,       # (H, H)      bf16  decoder layer 1 weight (pre-transposed)
    b1_ref,       # (1, H)      f32
    w2_ref,       # (H, 1)      bf16  decoder layer 2 weight (pre-transposed)
    b2_ref,       # (1, 1)      f32
    out_ref,      # (TB, 1)     f32
    enc_ref,      # scratch (TB, S, H) f32: LSTM hidden states (batch-major)
    *,
    n_iters, use_tanh, C,
):
    TB, S, E = x_ref.shape
    H = h0_ref.shape[1]
    f32 = jnp.float32
    bf16 = jnp.bfloat16

    # ---- LSTM input projection hoisted out of the recurrence: one big MXU matmul.
    x2d = x_ref[...].reshape(TB * S, E).astype(bf16)                  # (TB*S, E)
    xw = jnp.dot(x2d, w_ih_ref[...], preferred_element_type=f32) + b_lstm_ref[...]
    xw = xw.reshape(TB, S, 4 * H)                                     # (TB, S, 4H) f32

    w_hh = w_hh_ref[...]                                              # bf16 (H, 4H)
    h = jnp.broadcast_to(h0_ref[...], (TB, H)).astype(f32)
    c = jnp.broadcast_to(c0_ref[...], (TB, H)).astype(f32)

    # ---- LSTM recurrence, fully unrolled (S is small & static). PyTorch gate
    #      order (i, f, g, o). Per step only a (TB,H)@(H,4H) matmul remains.
    #      NOTE: for large S this should become a fori_loop over the scratch.
    for t in range(S):
        gates = xw[:, t, :] + jnp.dot(h.astype(bf16), w_hh,
                                      preferred_element_type=f32)     # (TB, 4H) f32
        i_g = jax.nn.sigmoid(gates[:, 0:H])
        f_g = jax.nn.sigmoid(gates[:, H:2 * H])
        g_g = jnp.tanh(gates[:, 2 * H:3 * H])
        o_g = jax.nn.sigmoid(gates[:, 3 * H:4 * H])
        c = f_g * c + i_g * g_g
        h = o_g * jnp.tanh(c)
        enc_ref[:, t, :] = h                                          # static index store

    # ---- project_ref (Conv1d k=1) hoisted: one (TB*S,H)@(H,H) matmul, batch-major e.
    enc = enc_ref[...]                                                # (TB, S, H) f32
    e2d = jnp.dot(enc.reshape(TB * S, H).astype(bf16), wref_ref[...],
                  preferred_element_type=f32) + bref_ref[...]
    e = e2d.reshape(TB, S, H)                                         # (TB, S, H) f32

    # ---- attention process block (batch-major: softmax max/sum reduce over the
    #      lane axis S; weighted sum is a batched MXU matmul). Invariant loads hoisted.
    wq = wq_ref[...]                                                  # bf16 (H, H)
    bq = bq_ref[...]                                                  # (1, H)
    v3 = v_ref[...].reshape(1, 1, H)                                  # (1, 1, H)
    state = h                                                         # (TB, H) == enc_h_t[-1]
    for _ in range(n_iters):
        q = jnp.dot(state.astype(bf16), wq, preferred_element_type=f32) + bq   # (TB, H)
        u = jnp.sum(v3 * jnp.tanh(q[:, None, :] + e), axis=2)                  # (TB, S)
        logits = C * jnp.tanh(u) if use_tanh else u
        m = jnp.max(logits, axis=-1, keepdims=True)                             # lane reduce
        p = jnp.exp(logits - m)
        attn = p * pl.reciprocal(jnp.sum(p, axis=-1, keepdims=True), approx=True)
        # weighted sum of e over S: batched (1,S)@(S,H) matmul per batch row
        # (kept f32: tiny op, preserves attention-average accuracy).
        state = jnp.einsum("bqs,bsh->bqh", attn[:, None, :], e,
                           preferred_element_type=f32)[:, 0, :]                 # (TB, H)

    # ---- decoder MLP ---------------------------------------------------------
    hdec = jnp.maximum(
        jnp.dot(state.astype(bf16), w1_ref[...], preferred_element_type=f32)
        + b1_ref[...], 0.0)
    out_ref[...] = (jnp.dot(hdec.astype(bf16), w2_ref[...],
                            preferred_element_type=f32) + b2_ref[...])


# ----------------------------------------------------------------------------
# Wrapper: parameter plumbing + pallas_call (batch grid, bf16 weights)
# ----------------------------------------------------------------------------
def _vmem_limit_bytes(TB, S, E, H):
    """Working-set estimate with headroom; scales with the batch tile."""
    f32b, bf16b = 4, 2
    weights = bf16b * (E * 4 * H + H * 4 * H + 3 * H * H + H)
    smalls = f32b * (3 * 4 * H + 6 * H + 4)
    block = (2 * f32b * TB * S * E          # x block (double-buffered)
             + f32b * TB * S * H            # enc scratch
             + f32b * TB * S * 4 * H        # xw live value
             + 2 * f32b * TB * S * H        # e + tanh temporary
             + 4 * f32b * TB * 4 * H)       # misc per-step values
    est = weights + smalls + block
    # 16 MiB floor; 64 MiB cap keeps us within every generation (v7x has 64 MiB/TC).
    return int(min(max(3 * est, 16 * (1 << 20)), 64 * (1 << 20)))


def critic_forward_pallas(x, params, *, n_iters, use_tanh, C, batch_tile=None):
    """x: (batch, sourceL, embedding_dim) float32 -> (batch, 1) float32."""
    B, S, E = x.shape
    H = params["w_hh"].shape[1]
    TB = B if batch_tile is None else min(batch_tile, B)
    grid = (pl.cdiv(B, TB),)

    f32, bf16 = jnp.float32, jnp.bfloat16
    args = (
        x.astype(f32),                                               # (B, S, E)
        params["init_hx"][None, :].astype(f32),                      # (1, H)
        params["init_cx"][None, :].astype(f32),                      # (1, H)
        params["w_ih"].T.astype(bf16),                               # (E, 4H)
        params["w_hh"].T.astype(bf16),                               # (H, 4H)
        (params["b_ih"] + params["b_hh"])[None, :].astype(f32),      # (1, 4H)
        params["w_q"].T.astype(bf16), params["b_q"][None, :].astype(f32),
        params["w_ref"].T.astype(bf16), params["b_ref"][None, :].astype(f32),
        params["v"][None, :].astype(f32),
        params["w1"].T.astype(bf16), params["b1"][None, :].astype(f32),
        params["w2"].T.astype(bf16), params["b2"][None, :].astype(f32),
    )

    def _full(shape):
        nd = len(shape)
        return pl.BlockSpec(shape, lambda b, _nd=nd: (0,) * _nd)

    in_specs = [pl.BlockSpec((TB, S, E), lambda b: (b, 0, 0))]       # batch-tiled input
    in_specs += [_full(a.shape) for a in args[1:]]                   # weights: untiled
    out_specs = pl.BlockSpec((TB, 1), lambda b: (b, 0))
    # NOTE: for large B one would emit the result lane-dense as (1, B); at B=2 the
    # narrow store is negligible so we keep the module's natural (B, 1) output.

    kernel = functools.partial(
        _critic_kernel, n_iters=n_iters, use_tanh=use_tanh, C=C)

    return pl.pallas_call(
        kernel,
        out_shape=jax.ShapeDtypeStruct((B, 1), jnp.float32),
        grid=grid,
        in_specs=in_specs,
        out_specs=out_specs,
        scratch_shapes=[pltpu.VMEM((TB, S, H), jnp.float32)],        # enc (batch-major)
        compiler_params=pltpu.CompilerParams(
            dimension_semantics=("parallel",),                       # megacore over batch
            vmem_limit_bytes=_vmem_limit_bytes(TB, S, E, H)),
    )(*args)


# ----------------------------------------------------------------------------
# Pure-JAX reference (mirrors the PyTorch forward) for validation.
# matmul_dtype=bfloat16 emulates the kernel's MXU operand casting.
# ----------------------------------------------------------------------------
def reference_forward(x, params, *, n_iters, use_tanh, C, matmul_dtype=jnp.float32):
    f32 = jnp.float32

    def mm(a, b):
        return jnp.dot(a.astype(matmul_dtype), b.astype(matmul_dtype),
                       preferred_element_type=f32)

    B, S, E = x.shape
    H = params["w_hh"].shape[1]
    h = jnp.broadcast_to(params["init_hx"][None, :], (B, H)).astype(f32)
    c = jnp.broadcast_to(params["init_cx"][None, :], (B, H)).astype(f32)
    w_ih_t, w_hh_t = params["w_ih"].T, params["w_hh"].T
    b_lstm = (params["b_ih"] + params["b_hh"])[None, :]
    enc = []
    for t in range(S):
        gates = mm(x[:, t, :], w_ih_t) + mm(h, w_hh_t) + b_lstm
        i = jax.nn.sigmoid(gates[:, :H])
        f = jax.nn.sigmoid(gates[:, H:2 * H])
        g = jnp.tanh(gates[:, 2 * H:3 * H])
        o = jax.nn.sigmoid(gates[:, 3 * H:])
        c = f * c + i * g
        h = o * jnp.tanh(c)
        enc.append(h)
    enc = jnp.stack(enc, axis=1)                                      # (B, S, H)
    e = (mm(enc.reshape(B * S, H), params["w_ref"].T)
         + params["b_ref"][None, :]).reshape(B, S, H)
    state = h
    for _ in range(n_iters):
        q = mm(state, params["w_q"].T) + params["b_q"][None, :]       # (B, H)
        u = jnp.sum(params["v"][None, None, :] * jnp.tanh(q[:, None, :] + e),
                    axis=-1)                                          # (B, S)
        logits = C * jnp.tanh(u) if use_tanh else u
        a = jax.nn.softmax(logits, axis=-1)
        state = jnp.einsum("bs,bsh->bh", a, e)
    hd = jax.nn.relu(mm(state, params["w1"].T) + params["b1"][None, :])
    return mm(hd, params["w2"].T) + params["b2"][None, :]             # (B, 1)


# ----------------------------------------------------------------------------
# Deterministic parameter init (shapes from the module's __init__)
# ----------------------------------------------------------------------------
def init_params(key, embedding_dim, hidden_dim):
    E, H = embedding_dim, hidden_dim
    ks = jax.random.split(key, 15)
    u = lambda k, shape, b: jax.random.uniform(k, shape, jnp.float32, -b, b)
    s = 1.0 / math.sqrt(H)
    return dict(
        # LSTM (single layer)
        w_ih=u(ks[0], (4 * H, E), s),
        w_hh=u(ks[1], (4 * H, H), s),
        b_ih=u(ks[2], (4 * H,), s),
        b_hh=u(ks[3], (4 * H,), s),
        init_hx=u(ks[4], (H,), s),
        init_cx=u(ks[5], (H,), s),
        # Attention process block
        w_q=u(ks[6], (H, H), s),
        b_q=u(ks[7], (H,), s),
        w_ref=u(ks[8], (H, H), s),        # Conv1d(dim, dim, 1) weight squeezed
        b_ref=u(ks[9], (H,), s),
        v=u(ks[10], (H,), s),
        # Decoder MLP
        w1=u(ks[11], (H, H), s),
        b1=u(ks[12], (H,), s),
        w2=u(ks[13], (1, H), s),
        b2=u(ks[14], (1,), s),
    )


if __name__ == "__main__":
    embedding_dim, hidden_dim = 8, 32
    batch, sourceL = 2, 8
    n_process_block_iters = 3
    tanh_exploration, use_tanh = 10.0, True

    key = jax.random.PRNGKey(0)
    kp, kx = jax.random.split(key)
    params = init_params(kp, embedding_dim, hidden_dim)
    x = jax.random.normal(kx, (batch, sourceL, embedding_dim), jnp.float32)

    out = critic_forward_pallas(
        x, params, n_iters=n_process_block_iters, use_tanh=use_tanh,
        C=tanh_exploration)
    out = jax.block_until_ready(out)
    assert out.shape == (batch, 1), out.shape

    # Tight check against a reference that emulates the kernel's bf16 MXU operands.
    ref_bf16 = reference_forward(
        x, params, n_iters=n_process_block_iters, use_tanh=use_tanh,
        C=tanh_exploration, matmul_dtype=jnp.bfloat16)
    # Loose check against the exact f32 PyTorch-equivalent reference
    # (difference is only bf16 matmul-operand rounding).
    ref_f32 = reference_forward(
        x, params, n_iters=n_process_block_iters, use_tanh=use_tanh,
        C=tanh_exploration, matmul_dtype=jnp.float32)

    if not jnp.allclose(out, ref_bf16, atol=5e-3, rtol=5e-3):
        raise AssertionError(f"mismatch vs bf16 reference: pallas={out} ref={ref_bf16}")
    if not jnp.allclose(out, ref_f32, atol=3e-2, rtol=3e-2):
        raise AssertionError(f"mismatch vs f32 reference: pallas={out} ref={ref_f32}")
    print("KERNEL_OK")
</pallas_src>

<mosaic_0001>
module attributes {stable_mosaic.version = 11 : i64} {
  func.func @_critic_kernel(%arg0: i32, %arg1: memref<2x8x8xf32, #tpu.memory_space<vmem>>, %arg2: memref<1x32xf32, #tpu.memory_space<vmem>>, %arg3: memref<1x32xf32, #tpu.memory_space<vmem>>, %arg4: memref<8x128xbf16, #tpu.memory_space<vmem>>, %arg5: memref<32x128xbf16, #tpu.memory_space<vmem>>, %arg6: memref<1x128xf32, #tpu.memory_space<vmem>>, %arg7: memref<32x32xbf16, #tpu.memory_space<vmem>>, %arg8: memref<1x32xf32, #tpu.memory_space<vmem>>, %arg9: memref<32x32xbf16, #tpu.memory_space<vmem>>, %arg10: memref<1x32xf32, #tpu.memory_space<vmem>>, %arg11: memref<1x32xf32, #tpu.memory_space<vmem>>, %arg12: memref<32x32xbf16, #tpu.memory_space<vmem>>, %arg13: memref<1x32xf32, #tpu.memory_space<vmem>>, %arg14: memref<32x1xbf16, #tpu.memory_space<vmem>>, %arg15: memref<1x1xf32, #tpu.memory_space<vmem>>, %arg16: memref<2x1xf32, #tpu.memory_space<vmem>>, %arg17: memref<2x8x32xf32, #tpu.memory_space<vmem>>) attributes {dimension_semantics = [#tpu.dimension_semantics<parallel>], iteration_bounds = array<i64: 1>, scalar_prefetch = 0 : i64, scratch_operands = 1 : i64, tpu.core_type = #tpu.core_type<tc>, window_params = [{transform_indices = @transform_0, window_bounds = array<i64: 2, 8, 8>}, {pipeline_mode = #tpu.pipeline_mode<synchronous>, transform_indices = @transform_1, window_bounds = array<i64: 1, 32>}, {pipeline_mode = #tpu.pipeline_mode<synchronous>, transform_indices = @transform_2, window_bounds = array<i64: 1, 32>}, {pipeline_mode = #tpu.pipeline_mode<synchronous>, transform_indices = @transform_3, window_bounds = array<i64: 8, 128>}, {pipeline_mode = #tpu.pipeline_mode<synchronous>, transform_indices = @transform_4, window_bounds = array<i64: 32, 128>}, {pipeline_mode = #tpu.pipeline_mode<synchronous>, transform_indices = @transform_5, window_bounds = array<i64: 1, 128>}, {pipeline_mode = #tpu.pipeline_mode<synchronous>, transform_indices = @transform_6, window_bounds = array<i64: 32, 32>}, {pipeline_mode = #tpu.pipeline_mode<synchronous>, transform_indices = @transform_7, window_bounds = array<i64: 1, 32>}, {pipeline_mode = #tpu.pipeline_mode<synchronous>, transform_indices = @transform_8, window_bounds = array<i64: 32, 32>}, {pipeline_mode = #tpu.pipeline_mode<synchronous>, transform_indices = @transform_9, window_bounds = array<i64: 1, 32>}, {pipeline_mode = #tpu.pipeline_mode<synchronous>, transform_indices = @transform_10, window_bounds = array<i64: 1, 32>}, {pipeline_mode = #tpu.pipeline_mode<synchronous>, transform_indices = @transform_11, window_bounds = array<i64: 32, 32>}, {pipeline_mode = #tpu.pipeline_mode<synchronous>, transform_indices = @transform_12, window_bounds = array<i64: 1, 32>}, {pipeline_mode = #tpu.pipeline_mode<synchronous>, transform_indices = @transform_13, window_bounds = array<i64: 32, 1>}, {pipeline_mode = #tpu.pipeline_mode<synchronous>, transform_indices = @transform_14, window_bounds = array<i64: 1, 1>}, {transform_indices = @transform_15, window_bounds = array<i64: 2, 1>}]} {
    %c0 = arith.constant 0 : index
    %c0_0 = arith.constant 0 : index
    %c0_1 = arith.constant 0 : index
    %0 = vector.load %arg1[%c0, %c0_0, %c0_1] : memref<2x8x8xf32, #tpu.memory_space<vmem>>, vector<2x8x8xf32>
    %1 = vector.shape_cast %0 : vector<2x8x8xf32> to vector<16x8xf32>
    %2 = arith.truncf %1 : vector<16x8xf32> to vector<16x8xbf16>
    %c0_2 = arith.constant 0 : index
    %c0_3 = arith.constant 0 : index
    %3 = vector.load %arg4[%c0_2, %c0_3] : memref<8x128xbf16, #tpu.memory_space<vmem>>, vector<8x128xbf16>
    %cst = arith.constant dense<0.000000e+00> : vector<16x128xf32>
    %4 = tpu.matmul %2, %3, %cst {dimension_numbers = #tpu.dot_dimension_numbers<[1], [0], [0], [1], [0, 0, 1, 1], [], []>} : vector<16x8xbf16>, vector<8x128xbf16>, vector<16x128xf32> -> vector<16x128xf32>
    %c0_4 = arith.constant 0 : index
    %c0_5 = arith.constant 0 : index
    %5 = vector.load %arg6[%c0_4, %c0_5] : memref<1x128xf32, #tpu.memory_space<vmem>>, vector<1x128xf32>
    %6 = vector.broadcast %5 : vector<1x128xf32> to vector<16x128xf32>
    %7 = arith.addf %4, %6 : vector<16x128xf32>
    %8 = vector.shape_cast %7 : vector<16x128xf32> to vector<2x8x128xf32>
    %c0_6 = arith.constant 0 : index
    %c0_7 = arith.constant 0 : index
    %9 = vector.load %arg5[%c0_6, %c0_7] : memref<32x128xbf16, #tpu.memory_space<vmem>>, vector<32x128xbf16>
    %c0_8 = arith.constant 0 : index
    %c0_9 = arith.constant 0 : index
    %10 = vector.load %arg2[%c0_8, %c0_9] : memref<1x32xf32, #tpu.memory_space<vmem>>, vector<1x32xf32>
    %11 = vector.shape_cast %10 : vector<1x32xf32> to vector<1x32xf32>
    %12 = vector.broadcast %11 : vector<1x32xf32> to vector<2x32xf32>
    %c0_10 = arith.constant 0 : index
    %c0_11 = arith.constant 0 : index
    %13 = vector.load %arg3[%c0_10, %c0_11] : memref<1x32xf32, #tpu.memory_space<vmem>>, vector<1x32xf32>
    %14 = vector.shape_cast %13 : vector<1x32xf32> to vector<1x32xf32>
    %15 = vector.broadcast %14 : vector<1x32xf32> to vector<2x32xf32>
    %16 = vector.extract_strided_slice %8 {offsets = [0, 0, 0], sizes = [2, 1, 128], strides = [1, 1, 1]} : vector<2x8x128xf32> to vector<2x1x128xf32>
    %17 = vector.shape_cast %16 : vector<2x1x128xf32> to vector<2x128xf32>
    %18 = arith.truncf %12 : vector<2x32xf32> to vector<2x32xbf16>
    %cst_12 = arith.constant dense<0.000000e+00> : vector<2x128xf32>
    %19 = tpu.matmul %18, %9, %cst_12 {dimension_numbers = #tpu.dot_dimension_numbers<[1], [0], [0], [1], [0, 0, 1, 1], [], []>} : vector<2x32xbf16>, vector<32x128xbf16>, vector<2x128xf32> -> vector<2x128xf32>
    %20 = arith.addf %17, %19 : vector<2x128xf32>
    %21 = vector.extract_strided_slice %20 {offsets = [0, 0], sizes = [2, 32], strides = [1, 1]} : vector<2x128xf32> to vector<2x32xf32>
    %22 = arith.negf %21 : vector<2x32xf32>
    %23 = math.exp %22 : vector<2x32xf32>
    %cst_13 = arith.constant 1.000000e+00 : f32
    %24 = vector.broadcast %cst_13 : f32 to vector<2x32xf32>
    %25 = arith.addf %24, %23 : vector<2x32xf32>
    %26 = arith.divf %24, %25 : vector<2x32xf32>
    %27 = vector.extract_strided_slice %20 {offsets = [0, 32], sizes = [2, 32], strides = [1, 1]} : vector<2x128xf32> to vector<2x32xf32>
    %28 = arith.negf %27 : vector<2x32xf32>
    %29 = math.exp %28 : vector<2x32xf32>
    %cst_14 = arith.constant 1.000000e+00 : f32
    %30 = vector.broadcast %cst_14 : f32 to vector<2x32xf32>
    %31 = arith.addf %30, %29 : vector<2x32xf32>
    %32 = arith.divf %30, %31 : vector<2x32xf32>
    %33 = vector.extract_strided_slice %20 {offsets = [0, 64], sizes = [2, 32], strides = [1, 1]} : vector<2x128xf32> to vector<2x32xf32>
    %34 = math.tanh %33 : vector<2x32xf32>
    %35 = vector.extract_strided_slice %20 {offsets = [0, 96], sizes = [2, 32], strides = [1, 1]} : vector<2x128xf32> to vector<2x32xf32>
    %36 = arith.negf %35 : vector<2x32xf32>
    %37 = math.exp %36 : vector<2x32xf32>
    %cst_15 = arith.constant 1.000000e+00 : f32
    %38 = vector.broadcast %cst_15 : f32 to vector<2x32xf32>
    %39 = arith.addf %38, %37 : vector<2x32xf32>
    %40 = arith.divf %38, %39 : vector<2x32xf32>
    %41 = arith.mulf %32, %15 : vector<2x32xf32>
    %42 = arith.mulf %26, %34 : vector<2x32xf32>
    %43 = arith.addf %41, %42 : vector<2x32xf32>
    %44 = math.tanh %43 : vector<2x32xf32>
    %45 = arith.mulf %40, %44 : vector<2x32xf32>
    %c0_16 = arith.constant 0 : index
    %c0_17 = arith.constant 0 : index
    %c0_18 = arith.constant 0 : index
    %46 = vector.load %arg17[%c0_16, %c0_17, %c0_18] : memref<2x8x32xf32, #tpu.memory_space<vmem>>, vector<2x1x32xf32>
    %47 = vector.shape_cast %46 : vector<2x1x32xf32> to vector<2x32xf32>
    %48 = vector.shape_cast %45 : vector<2x32xf32> to vector<2x1x32xf32>
    tpu.vector_store %arg17[%c0_16, %c0_17, %c0_18], %48 {strides = array<i32>} : memref<2x8x32xf32, #tpu.memory_space<vmem>>, vector<2x1x32xf32>,
    %49 = vector.extract_strided_slice %8 {offsets = [0, 1, 0], sizes = [2, 1, 128], strides = [1, 1, 1]} : vector<2x8x128xf32> to vector<2x1x128xf32>
    %50 = vector.shape_cast %49 : vector<2x1x128xf32> to vector<2x128xf32>
    %51 = arith.truncf %45 : vector<2x32xf32> to vector<2x32xbf16>
    %cst_19 = arith.constant dense<0.000000e+00> : vector<2x128xf32>
    %52 = tpu.matmul %51, %9, %cst_19 {dimension_numbers = #tpu.dot_dimension_numbers<[1], [0], [0], [1], [0, 0, 1, 1], [], []>} : vector<2x32xbf16>, vector<32x128xbf16>, vector<2x128xf32> -> vector<2x128xf32>
    %53 = arith.addf %50, %52 : vector<2x128xf32>
    %54 = vector.extract_strided_slice %53 {offsets = [0, 0], sizes = [2, 32], strides = [1, 1]} : vector<2x128xf32> to vector<2x32xf32>
    %55 = arith.negf %54 : vector<2x32xf32>
    %56 = math.exp %55 : vector<2x32xf32>
    %cst_20 = arith.constant 1.000000e+00 : f32
    %57 = vector.broadcast %cst_20 : f32 to vector<2x32xf32>
    %58 = arith.addf %57, %56 : vector<2x32xf32>
    %59 = arith.divf %57, %58 : vector<2x32xf32>
    %60 = vector.extract_strided_slice %53 {offsets = [0, 32], sizes = [2, 32], strides = [1, 1]} : vector<2x128xf32> to vector<2x32xf32>
    %61 = arith.negf %60 : vector<2x32xf32>
    %62 = math.exp %61 : vector<2x32xf32>
    %cst_21 = arith.constant 1.000000e+00 : f32
    %63 = vector.broadcast %cst_21 : f32 to vector<2x32xf32>
    %64 = arith.addf %63, %62 : vector<2x32xf32>
    %65 = arith.divf %63, %64 : vector<2x32xf32>
    %66 = vector.extract_strided_slice %53 {offsets = [0, 64], sizes = [2, 32], strides = [1, 1]} : vector<2x128xf32> to vector<2x32xf32>
    %67 = math.tanh %66 : vector<2x32xf32>
    %68 = vector.extract_strided_slice %53 {offsets = [0, 96], sizes = [2, 32], strides = [1, 1]} : vector<2x128xf32> to vector<2x32xf32>
    %69 = arith.negf %68 : vector<2x32xf32>
    %70 = math.exp %69 : vector<2x32xf32>
    %cst_22 = arith.constant 1.000000e+00 : f32
    %71 = vector.broadcast %cst_22 : f32 to vector<2x32xf32>
    %72 = arith.addf %71, %70 : vector<2x32xf32>
    %73 = arith.divf %71, %72 : vector<2x32xf32>
    %74 = arith.mulf %65, %43 : vector<2x32xf32>
    %75 = arith.mulf %59, %67 : vector<2x32xf32>
    %76 = arith.addf %74, %75 : vector<2x32xf32>
    %77 = math.tanh %76 : vector<2x32xf32>
    %78 = arith.mulf %73, %77 : vector<2x32xf32>
    %c0_23 = arith.constant 0 : index
    %c1 = arith.constant 1 : index
    %c0_24 = arith.constant 0 : index
    %79 = vector.load %arg17[%c0_23, %c1, %c0_24] : memref<2x8x32xf32, #tpu.memory_space<vmem>>, vector<2x1x32xf32>
    %80 = vector.shape_cast %79 : vector<2x1x32xf32> to vector<2x32xf32>
    %81 = vector.shape_cast %78 : vector<2x32xf32> to vector<2x1x32xf32>
    tpu.vector_store %arg17[%c0_23, %c1, %c0_24], %81 {strides = array<i32>} : memref<2x8x32xf32, #tpu.memory_space<vmem>>, vector<2x1x32xf32>,
    %82 = vector.extract_strided_slice %8 {offsets = [0, 2, 0], sizes = [2, 1, 128], strides = [1, 1, 1]} : vector<2x8x128xf32> to vector<2x1x128xf32>
    %83 = vector.shape_cast %82 : vector<2x1x128xf32> to vector<2x128xf32>
    %84 = arith.truncf %78 : vector<2x32xf32> to vector<2x32xbf16>
    %cst_25 = arith.constant dense<0.000000e+00> : vector<2x128xf32>
    %85 = tpu.matmul %84, %9, %cst_25 {dimension_numbers = #tpu.dot_dimension_numbers<[1], [0], [0], [1], [0, 0, 1, 1], [], []>} : vector<2x32xbf16>, vector<32x128xbf16>, vector<2x128xf32> -> vector<2x128xf32>
    %86 = arith.addf %83, %85 : vector<2x128xf32>
    %87 = vector.extract_strided_slice %86 {offsets = [0, 0], sizes = [2, 32], strides = [1, 1]} : vector<2x128xf32> to vector<2x32xf32>
    %88 = arith.negf %87 : vector<2x32xf32>
    %89 = math.exp %88 : vector<2x32xf32>
    %cst_26 = arith.constant 1.000000e+00 : f32
    %90 = vector.broadcast %cst_26 : f32 to vector<2x32xf32>
    %91 = arith.addf %90, %89 : vector<2x32xf32>
    %92 = arith.divf %90, %91 : vector<2x32xf32>
    %93 = vector.extract_strided_slice %86 {offsets = [0, 32], sizes = [2, 32], strides = [1, 1]} : vector<2x128xf32> to vector<2x32xf32>
    %94 = arith.negf %93 : vector<2x32xf32>
    %95 = math.exp %94 : vector<2x32xf32>
    %cst_27 = arith.constant 1.000000e+00 : f32
    %96 = vector.broadcast %cst_27 : f32 to vector<2x32xf32>
    %97 = arith.addf %96, %95 : vector<2x32xf32>
    %98 = arith.divf %96, %97 : vector<2x32xf32>
    %99 = vector.extract_strided_slice %86 {offsets = [0, 64], sizes = [2, 32], strides = [1, 1]} : vector<2x128xf32> to vector<2x32xf32>
    %100 = math.tanh %99 : vector<2x32xf32>
    %101 = vector.extract_strided_slice %86 {offsets = [0, 96], sizes = [2, 32], strides = [1, 1]} : vector<2x128xf32> to vector<2x32xf32>
    %102 = arith.negf %101 : vector<2x32xf32>
    %103 = math.exp %102 : vector<2x32xf32>
    %cst_28 = arith.constant 1.000000e+00 : f32
    %104 = vector.broadcast %cst_28 : f32 to vector<2x32xf32>
    %105 = arith.addf %104, %103 : vector<2x32xf32>
    %106 = arith.divf %104, %105 : vector<2x32xf32>
    %107 = arith.mulf %98, %76 : vector<2x32xf32>
    %108 = arith.mulf %92, %100 : vector<2x32xf32>
    %109 = arith.addf %107, %108 : vector<2x32xf32>
    %110 = math.tanh %109 : vector<2x32xf32>
    %111 = arith.mulf %106, %110 : vector<2x32xf32>
    %c0_29 = arith.constant 0 : index
    %c2 = arith.constant 2 : index
    %c0_30 = arith.constant 0 : index
    %112 = vector.load %arg17[%c0_29, %c2, %c0_30] : memref<2x8x32xf32, #tpu.memory_space<vmem>>, vector<2x1x32xf32>
    %113 = vector.shape_cast %112 : vector<2x1x32xf32> to vector<2x32xf32>
    %114 = vector.shape_cast %111 : vector<2x32xf32> to vector<2x1x32xf32>
    tpu.vector_store %arg17[%c0_29, %c2, %c0_30], %114 {strides = array<i32>} : memref<2x8x32xf32, #tpu.memory_space<vmem>>, vector<2x1x32xf32>,
    %115 = vector.extract_strided_slice %8 {offsets = [0, 3, 0], sizes = [2, 1, 128], strides = [1, 1, 1]} : vector<2x8x128xf32> to vector<2x1x128xf32>
    %116 = vector.shape_cast %115 : vector<2x1x128xf32> to vector<2x128xf32>
    %117 = arith.truncf %111 : vector<2x32xf32> to vector<2x32xbf16>
    %cst_31 = arith.constant dense<0.000000e+00> : vector<2x128xf32>
    %118 = tpu.matmul %117, %9, %cst_31 {dimension_numbers = #tpu.dot_dimension_numbers<[1], [0], [0], [1], [0, 0, 1, 1], [], []>} : vector<2x32xbf16>, vector<32x128xbf16>, vector<2x128xf32> -> vector<2x128xf32>
    %119 = arith.addf %116, %118 : vector<2x128xf32>
    %120 = vector.extract_strided_slice %119 {offsets = [0, 0], sizes = [2, 32], strides = [1, 1]} : vector<2x128xf32> to vector<2x32xf32>
    %121 = arith.negf %120 : vector<2x32xf32>
    %122 = math.exp %121 : vector<2x32xf32>
    %cst_32 = arith.constant 1.000000e+00 : f32
    %123 = vector.broadcast %cst_32 : f32 to vector<2x32xf32>
    %124 = arith.addf %123, %122 : vector<2x32xf32>
    %125 = arith.divf %123, %124 : vector<2x32xf32>
    %126 = vector.extract_strided_slice %119 {offsets = [0, 32], sizes = [2, 32], strides = [1, 1]} : vector<2x128xf32> to vector<2x32xf32>
    %127 = arith.negf %126 : vector<2x32xf32>
    %128 = math.exp %127 : vector<2x32xf32>
    %cst_33 = arith.constant 1.000000e+00 : f32
    %129 = vector.broadcast %cst_33 : f32 to vector<2x32xf32>
    %130 = arith.addf %129, %128 : vector<2x32xf32>
    %131 = arith.divf %129, %130 : vector<2x32xf32>
    %132 = vector.extract_strided_slice %119 {offsets = [0, 64], sizes = [2, 32], strides = [1, 1]} : vector<2x128xf32> to vector<2x32xf32>
    %133 = math.tanh %132 : vector<2x32xf32>
    %134 = vector.extract_strided_slice %119 {offsets = [0, 96], sizes = [2, 32], strides = [1, 1]} : vector<2x128xf32> to vector<2x32xf32>
    %135 = arith.negf %134 : vector<2x32xf32>
    %136 = math.exp %135 : vector<2x32xf32>
    %cst_34 = arith.constant 1.000000e+00 : f32
    %137 = vector.broadcast %cst_34 : f32 to vector<2x32xf32>
    %138 = arith.addf %137, %136 : vector<2x32xf32>
    %139 = arith.divf %137, %138 : vector<2x32xf32>
    %140 = arith.mulf %131, %109 : vector<2x32xf32>
    %141 = arith.mulf %125, %133 : vector<2x32xf32>
    %142 = arith.addf %140, %141 : vector<2x32xf32>
    %143 = math.tanh %142 : vector<2x32xf32>
    %144 = arith.mulf %139, %143 : vector<2x32xf32>
    %c0_35 = arith.constant 0 : index
    %c3 = arith.constant 3 : index
    %c0_36 = arith.constant 0 : index
    %145 = vector.load %arg17[%c0_35, %c3, %c0_36] : memref<2x8x32xf32, #tpu.memory_space<vmem>>, vector<2x1x32xf32>
    %146 = vector.shape_cast %145 : vector<2x1x32xf32> to vector<2x32xf32>
    %147 = vector.shape_cast %144 : vector<2x32xf32> to vector<2x1x32xf32>
    tpu.vector_store %arg17[%c0_35, %c3, %c0_36], %147 {strides = array<i32>} : memref<2x8x32xf32, #tpu.memory_space<vmem>>, vector<2x1x32xf32>,
    %148 = vector.extract_strided_slice %8 {offsets = [0, 4, 0], sizes = [2, 1, 128], strides = [1, 1, 1]} : vector<2x8x128xf32> to vector<2x1x128xf32>
    %149 = vector.shape_cast %148 : vector<2x1x128xf32> to vector<2x128xf32>
    %150 = arith.truncf %144 : vector<2x32xf32> to vector<2x32xbf16>
    %cst_37 = arith.constant dense<0.000000e+00> : vector<2x128xf32>
    %151 = tpu.matmul %150, %9, %cst_37 {dimension_numbers = #tpu.dot_dimension_numbers<[1], [0], [0], [1], [0, 0, 1, 1], [], []>} : vector<2x32xbf16>, vector<32x128xbf16>, vector<2x128xf32> -> vector<2x128xf32>
    %152 = arith.addf %149, %151 : vector<2x128xf32>
    %153 = vector.extract_strided_slice %152 {offsets = [0, 0], sizes = [2, 32], strides = [1, 1]} : vector<2x128xf32> to vector<2x32xf32>
    %154 = arith.negf %153 : vector<2x32xf32>
    %155 = math.exp %154 : vector<2x32xf32>
    %cst_38 = arith.constant 1.000000e+00 : f32
    %156 = vector.broadcast %cst_38 : f32 to vector<2x32xf32>
    %157 = arith.addf %156, %155 : vector<2x32xf32>
    %158 = arith.divf %156, %157 : vector<2x32xf32>
    %159 = vector.extract_strided_slice %152 {offsets = [0, 32], sizes = [2, 32], strides = [1, 1]} : vector<2x128xf32> to vector<2x32xf32>
    %160 = arith.negf %159 : vector<2x32xf32>
    %161 = math.exp %160 : vector<2x32xf32>
    %cst_39 = arith.constant 1.000000e+00 : f32
    %162 = vector.broadcast %cst_39 : f32 to vector<2x32xf32>
    %163 = arith.addf %162, %161 : vector<2x32xf32>
    %164 = arith.divf %162, %163 : vector<2x32xf32>
    %165 = vector.extract_strided_slice %152 {offsets = [0, 64], sizes = [2, 32], strides = [1, 1]} : vector<2x128xf32> to vector<2x32xf32>
    %166 = math.tanh %165 : vector<2x32xf32>
    %167 = vector.extract_strided_slice %152 {offsets = [0, 96], sizes = [2, 32], strides = [1, 1]} : vector<2x128xf32> to vector<2x32xf32>
    %168 = arith.negf %167 : vector<2x32xf32>
    %169 = math.exp %168 : vector<2x32xf32>
    %cst_40 = arith.constant 1.000000e+00 : f32
    %170 = vector.broadcast %cst_40 : f32 to vector<2x32xf32>
    %171 = arith.addf %170, %169 : vector<2x32xf32>
    %172 = arith.divf %170, %171 : vector<2x32xf32>
    %173 = arith.mulf %164, %142 : vector<2x32xf32>
    %174 = arith.mulf %158, %166 : vector<2x32xf32>
    %175 = arith.addf %173, %174 : vector<2x32xf32>
    %176 = math.tanh %175 : vector<2x32xf32>
    %177 = arith.mulf %172, %176 : vector<2x32xf32>
    %c0_41 = arith.constant 0 : index
    %c4 = arith.constant 4 : index
    %c0_42 = arith.constant 0 : index
    %178 = vector.load %arg17[%c0_41, %c4, %c0_42] : memref<2x8x32xf32, #tpu.memory_space<vmem>>, vector<2x1x32xf32>
    %179 = vector.shape_cast %178 : vector<2x1x32xf32> to vector<2x32xf32>
    %180 = vector.shape_cast %177 : vector<2x32xf32> to vector<2x1x32xf32>
    tpu.vector_store %arg17[%c0_41, %c4, %c0_42], %180 {strides = array<i32>} : memref<2x8x32xf32, #tpu.memory_space<vmem>>, vector<2x1x32xf32>,
    %181 = vector.extract_strided_slice %8 {offsets = [0, 5, 0], sizes = [2, 1, 128], strides = [1, 1, 1]} : vector<2x8x128xf32> to vector<2x1x128xf32>
    %182 = vector.shape_cast %181 : vector<2x1x128xf32> to vector<2x128xf32>
    %183 = arith.truncf %177 : vector<2x32xf32> to vector<2x32xbf16>
    %cst_43 = arith.constant dense<0.000000e+00> : vector<2x128xf32>
    %184 = tpu.matmul %183, %9, %cst_43 {dimension_numbers = #tpu.dot_dimension_numbers<[1], [0], [0], [1], [0, 0, 1, 1], [], []>} : vector<2x32xbf16>, vector<32x128xbf16>, vector<2x128xf32> -> vector<2x128xf32>
    %185 = arith.addf %182, %184 : vector<2x128xf32>
    %186 = vector.extract_strided_slice %185 {offsets = [0, 0], sizes = [2, 32], strides = [1, 1]} : vector<2x128xf32> to vector<2x32xf32>
    %187 = arith.negf %186 : vector<2x32xf32>
    %188 = math.exp %187 : vector<2x32xf32>
    %cst_44 = arith.constant 1.000000e+00 : f32
    %189 = vector.broadcast %cst_44 : f32 to vector<2x32xf32>
    %190 = arith.addf %189, %188 : vector<2x32xf32>
    %191 = arith.divf %189, %190 : vector<2x32xf32>
    %192 = vector.extract_strided_slice %185 {offsets = [0, 32], sizes = [2, 32], strides = [1, 1]} : vector<2x128xf32> to vector<2x32xf32>
    %193 = arith.negf %192 : vector<2x32xf32>
    %194 = math.exp %193 : vector<2x32xf32>
    %cst_45 = arith.constant 1.000000e+00 : f32
    %195 = vector.broadcast %cst_45 : f32 to vector<2x32xf32>
    %196 = arith.addf %195, %194 : vector<2x32xf32>
    %197 = arith.divf %195, %196 : vector<2x32xf32>
    %198 = vector.extract_strided_slice %185 {offsets = [0, 64], sizes = [2, 32], strides = [1, 1]} : vector<2x128xf32> to vector<2x32xf32>
    %199 = math.tanh %198 : vector<2x32xf32>
    %200 = vector.extract_strided_slice %185 {offsets = [0, 96], sizes = [2, 32], strides = [1, 1]} : vector<2x128xf32> to vector<2x32xf32>
    %201 = arith.negf %200 : vector<2x32xf32>
    %202 = math.exp %201 : vector<2x32xf32>
    %cst_46 = arith.constant 1.000000e+00 : f32
    %203 = vector.broadcast %cst_46 : f32 to vector<2x32xf32>
    %204 = arith.addf %203, %202 : vector<2x32xf32>
    %205 = arith.divf %203, %204 : vector<2x32xf32>
    %206 = arith.mulf %197, %175 : vector<2x32xf32>
    %207 = arith.mulf %191, %199 : vector<2x32xf32>
    %208 = arith.addf %206, %207 : vector<2x32xf32>
    %209 = math.tanh %208 : vector<2x32xf32>
    %210 = arith.mulf %205, %209 : vector<2x32xf32>
    %c0_47 = arith.constant 0 : index
    %c5 = arith.constant 5 : index
    %c0_48 = arith.constant 0 : index
    %211 = vector.load %arg17[%c0_47, %c5, %c0_48] : memref<2x8x32xf32, #tpu.memory_space<vmem>>, vector<2x1x32xf32>
    %212 = vector.shape_cast %211 : vector<2x1x32xf32> to vector<2x32xf32>
    %213 = vector.shape_cast %210 : vector<2x32xf32> to vector<2x1x32xf32>
    tpu.vector_store %arg17[%c0_47, %c5, %c0_48], %213 {strides = array<i32>} : memref<2x8x32xf32, #tpu.memory_space<vmem>>, vector<2x1x32xf32>,
    %214 = vector.extract_strided_slice %8 {offsets = [0, 6, 0], sizes = [2, 1, 128], strides = [1, 1, 1]} : vector<2x8x128xf32> to vector<2x1x128xf32>
    %215 = vector.shape_cast %214 : vector<2x1x128xf32> to vector<2x128xf32>
    %216 = arith.truncf %210 : vector<2x32xf32> to vector<2x32xbf16>
    %cst_49 = arith.constant dense<0.000000e+00> : vector<2x128xf32>
    %217 = tpu.matmul %216, %9, %cst_49 {dimension_numbers = #tpu.dot_dimension_numbers<[1], [0], [0], [1], [0, 0, 1, 1], [], []>} : vector<2x32xbf16>, vector<32x128xbf16>, vector<2x128xf32> -> vector<2x128xf32>
    %218 = arith.addf %215, %217 : vector<2x128xf32>
    %219 = vector.extract_strided_slice %218 {offsets = [0, 0], sizes = [2, 32], strides = [1, 1]} : vector<2x128xf32> to vector<2x32xf32>
    %220 = arith.negf %219 : vector<2x32xf32>
    %221 = math.exp %220 : vector<2x32xf32>
    %cst_50 = arith.constant 1.000000e+00 : f32
    %222 = vector.broadcast %cst_50 : f32 to vector<2x32xf32>
    %223 = arith.addf %222, %221 : vector<2x32xf32>
    %224 = arith.divf %222, %223 : vector<2x32xf32>
    %225 = vector.extract_strided_slice %218 {offsets = [0, 32], sizes = [2, 32], strides = [1, 1]} : vector<2x128xf32> to vector<2x32xf32>
    %226 = arith.negf %225 : vector<2x32xf32>
    %227 = math.exp %226 : vector<2x32xf32>
    %cst_51 = arith.constant 1.000000e+00 : f32
    %228 = vector.broadcast %cst_51 : f32 to vector<2x32xf32>
    %229 = arith.addf %228, %227 : vector<2x32xf32>
    %230 = arith.divf %228, %229 : vector<2x32xf32>
    %231 = vector.extract_strided_slice %218 {offsets = [0, 64], sizes = [2, 32], strides = [1, 1]} : vector<2x128xf32> to vector<2x32xf32>
    %232 = math.tanh %231 : vector<2x32xf32>
    %233 = vector.extract_strided_slice %218 {offsets = [0, 96], sizes = [2, 32], strides = [1, 1]} : vector<2x128xf32> to vector<2x32xf32>
    %234 = arith.negf %233 : vector<2x32xf32>
    %235 = math.exp %234 : vector<2x32xf32>
    %cst_52 = arith.constant 1.000000e+00 : f32
    %236 = vector.broadcast %cst_52 : f32 to vector<2x32xf32>
    %237 = arith.addf %236, %235 : vector<2x32xf32>
    %238 = arith.divf %236, %237 : vector<2x32xf32>
    %239 = arith.mulf %230, %208 : vector<2x32xf32>
    %240 = arith.mulf %224, %232 : vector<2x32xf32>
    %241 = arith.addf %239, %240 : vector<2x32xf32>
    %242 = math.tanh %241 : vector<2x32xf32>
    %243 = arith.mulf %238, %242 : vector<2x32xf32>
    %c0_53 = arith.constant 0 : index
    %c6 = arith.constant 6 : index
    %c0_54 = arith.constant 0 : index
    %244 = vector.load %arg17[%c0_53, %c6, %c0_54] : memref<2x8x32xf32, #tpu.memory_space<vmem>>, vector<2x1x32xf32>
    %245 = vector.shape_cast %244 : vector<2x1x32xf32> to vector<2x32xf32>
    %246 = vector.shape_cast %243 : vector<2x32xf32> to vector<2x1x32xf32>
    tpu.vector_store %arg17[%c0_53, %c6, %c0_54], %246 {strides = array<i32>} : memref<2x8x32xf32, #tpu.memory_space<vmem>>, vector<2x1x32xf32>,
    %247 = vector.extract_strided_slice %8 {offsets = [0, 7, 0], sizes = [2, 1, 128], strides = [1, 1, 1]} : vector<2x8x128xf32> to vector<2x1x128xf32>
    %248 = vector.shape_cast %247 : vector<2x1x128xf32> to vector<2x128xf32>
    %249 = arith.truncf %243 : vector<2x32xf32> to vector<2x32xbf16>
    %cst_55 = arith.constant dense<0.000000e+00> : vector<2x128xf32>
    %250 = tpu.matmul %249, %9, %cst_55 {dimension_numbers = #tpu.dot_dimension_numbers<[1], [0], [0], [1], [0, 0, 1, 1], [], []>} : vector<2x32xbf16>, vector<32x128xbf16>, vector<2x128xf32> -> vector<2x128xf32>
    %251 = arith.addf %248, %250 : vector<2x128xf32>
    %252 = vector.extract_strided_slice %251 {offsets = [0, 0], sizes = [2, 32], strides = [1, 1]} : vector<2x128xf32> to vector<2x32xf32>
    %253 = arith.negf %252 : vector<2x32xf32>
    %254 = math.exp %253 : vector<2x32xf32>
    %cst_56 = arith.constant 1.000000e+00 : f32
    %255 = vector.broadcast %cst_56 : f32 to vector<2x32xf32>
    %256 = arith.addf %255, %254 : vector<2x32xf32>
    %257 = arith.divf %255, %256 : vector<2x32xf32>
    %258 = vector.extract_strided_slice %251 {offsets = [0, 32], sizes = [2, 32], strides = [1, 1]} : vector<2x128xf32> to vector<2x32xf32>
    %259 = arith.negf %258 : vector<2x32xf32>
    %260 = math.exp %259 : vector<2x32xf32>
    %cst_57 = arith.constant 1.000000e+00 : f32
    %261 = vector.broadcast %cst_57 : f32 to vector<2x32xf32>
    %262 = arith.addf %261, %260 : vector<2x32xf32>
    %263 = arith.divf %261, %262 : vector<2x32xf32>
    %264 = vector.extract_strided_slice %251 {offsets = [0, 64], sizes = [2, 32], strides = [1, 1]} : vector<2x128xf32> to vector<2x32xf32>
    %265 = math.tanh %264 : vector<2x32xf32>
    %266 = vector.extract_strided_slice %251 {offsets = [0, 96], sizes = [2, 32], strides = [1, 1]} : vector<2x128xf32> to vector<2x32xf32>
    %267 = arith.negf %266 : vector<2x32xf32>
    %268 = math.exp %267 : vector<2x32xf32>
    %cst_58 = arith.constant 1.000000e+00 : f32
    %269 = vector.broadcast %cst_58 : f32 to vector<2x32xf32>
    %270 = arith.addf %269, %268 : vector<2x32xf32>
    %271 = arith.divf %269, %270 : vector<2x32xf32>
    %272 = arith.mulf %263, %241 : vector<2x32xf32>
    %273 = arith.mulf %257, %265 : vector<2x32xf32>
    %274 = arith.addf %272, %273 : vector<2x32xf32>
    %275 = math.tanh %274 : vector<2x32xf32>
    %276 = arith.mulf %271, %275 : vector<2x32xf32>
    %c0_59 = arith.constant 0 : index
    %c7 = arith.constant 7 : index
    %c0_60 = arith.constant 0 : index
    %277 = vector.load %arg17[%c0_59, %c7, %c0_60] : memref<2x8x32xf32, #tpu.memory_space<vmem>>, vector<2x1x32xf32>
    %278 = vector.shape_cast %277 : vector<2x1x32xf32> to vector<2x32xf32>
    %279 = vector.shape_cast %276 : vector<2x32xf32> to vector<2x1x32xf32>
    tpu.vector_store %arg17[%c0_59, %c7, %c0_60], %279 {strides = array<i32>} : memref<2x8x32xf32, #tpu.memory_space<vmem>>, vector<2x1x32xf32>,
    %c0_61 = arith.constant 0 : index
    %c0_62 = arith.constant 0 : index
    %c0_63 = arith.constant 0 : index
    %280 = vector.load %arg17[%c0_61, %c0_62, %c0_63] : memref<2x8x32xf32, #tpu.memory_space<vmem>>, vector<2x8x32xf32>
    %281 = vector.shape_cast %280 : vector<2x8x32xf32> to vector<16x32xf32>
    %282 = arith.truncf %281 : vector<16x32xf32> to vector<16x32xbf16>
    %c0_64 = arith.constant 0 : index
    %c0_65 = arith.constant 0 : index
    %283 = vector.load %arg9[%c0_64, %c0_65] : memref<32x32xbf16, #tpu.memory_space<vmem>>, vector<32x32xbf16>
    %cst_66 = arith.constant dense<0.000000e+00> : vector<16x32xf32>
    %284 = tpu.matmul %282, %283, %cst_66 {dimension_numbers = #tpu.dot_dimension_numbers<[1], [0], [0], [1], [0, 0, 1, 1], [], []>} : vector<16x32xbf16>, vector<32x32xbf16>, vector<16x32xf32> -> vector<16x32xf32>
    %c0_67 = arith.constant 0 : index
    %c0_68 = arith.constant 0 : index
    %285 = vector.load %arg10[%c0_67, %c0_68] : memref<1x32xf32, #tpu.memory_space<vmem>>, vector<1x32xf32>
    %286 = vector.broadcast %285 : vector<1x32xf32> to vector<16x32xf32>
    %287 = arith.addf %284, %286 : vector<16x32xf32>
    %288 = vector.shape_cast %287 : vector<16x32xf32> to vector<2x8x32xf32>
    %c0_69 = arith.constant 0 : index
    %c0_70 = arith.constant 0 : index
    %289 = vector.load %arg7[%c0_69, %c0_70] : memref<32x32xbf16, #tpu.memory_space<vmem>>, vector<32x32xbf16>
    %c0_71 = arith.constant 0 : index
    %c0_72 = arith.constant 0 : index
    %290 = vector.load %arg8[%c0_71, %c0_72] : memref<1x32xf32, #tpu.memory_space<vmem>>, vector<1x32xf32>
    %c0_73 = arith.constant 0 : index
    %c0_74 = arith.constant 0 : index
    %291 = vector.load %arg11[%c0_73, %c0_74] : memref<1x32xf32, #tpu.memory_space<vmem>>, vector<1x32xf32>
    %292 = vector.shape_cast %291 : vector<1x32xf32> to vector<1x1x32xf32>
    %293 = arith.truncf %276 : vector<2x32xf32> to vector<2x32xbf16>
    %cst_75 = arith.constant dense<0.000000e+00> : vector<2x32xf32>
    %294 = tpu.matmul %293, %289, %cst_75 {dimension_numbers = #tpu.dot_dimension_numbers<[1], [0], [0], [1], [0, 0, 1, 1], [], []>} : vector<2x32xbf16>, vector<32x32xbf16>, vector<2x32xf32> -> vector<2x32xf32>
    %295 = vector.broadcast %290 : vector<1x32xf32> to vector<2x32xf32>
    %296 = arith.addf %294, %295 : vector<2x32xf32>
    %297 = vector.shape_cast %296 : vector<2x32xf32> to vector<2x1x32xf32>
    %298 = vector.broadcast %297 : vector<2x1x32xf32> to vector<2x8x32xf32>
    %299 = arith.addf %298, %288 : vector<2x8x32xf32>
    %300 = math.tanh %299 : vector<2x8x32xf32>
    %301 = vector.broadcast %292 : vector<1x1x32xf32> to vector<2x8x32xf32>
    %302 = arith.mulf %301, %300 : vector<2x8x32xf32>
    %cst_76 = arith.constant dense<0.000000e+00> : vector<2x8xf32>
    %303 = vector.multi_reduction <add>, %302, %cst_76 [2] : vector<2x8x32xf32> to vector<2x8xf32>
    %304 = math.tanh %303 : vector<2x8xf32>
    %cst_77 = arith.constant 1.000000e+01 : f32
    %305 = vector.broadcast %cst_77 : f32 to vector<2x8xf32>
    %306 = arith.mulf %305, %304 : vector<2x8xf32>
    %cst_78 = arith.constant dense<0xFF800000> : vector<2xf32>
    %307 = vector.multi_reduction <maximumf>, %306, %cst_78 [1] : vector<2x8xf32> to vector<2xf32>
    %308 = vector.shape_cast %307 : vector<2xf32> to vector<2x1xf32>
    %309 = vector.broadcast %308 : vector<2x1xf32> to vector<2x8xf32>
    %310 = arith.subf %306, %309 : vector<2x8xf32>
    %311 = math.exp %310 : vector<2x8xf32>
    %cst_79 = arith.constant dense<0.000000e+00> : vector<2xf32>
    %312 = vector.multi_reduction <add>, %311, %cst_79 [1] : vector<2x8xf32> to vector<2xf32>
    %313 = vector.shape_cast %312 : vector<2xf32> to vector<2x1xf32>
    %314 = tpu.reciprocal %313 {approx = true} : vector<2x1xf32> -> vector<2x1xf32>
    %315 = vector.broadcast %314 : vector<2x1xf32> to vector<2x8xf32>
    %316 = arith.mulf %311, %315 : vector<2x8xf32>
    %317 = vector.shape_cast %316 : vector<2x8xf32> to vector<2x1x8xf32>
    "tpu.trace_start"() <{level = 10 : i32, message = "bqs,bsh->bqh"}> : () -> ()
    %cst_80 = arith.constant dense<0.000000e+00> : vector<2x1x32xf32>
    %318 = tpu.matmul %317, %288, %cst_80 {dimension_numbers = #tpu.dot_dimension_numbers<[2], [1], [1], [2], [0, 0, 0, 1, 1, 2], [0], [0]>} : vector<2x1x8xf32>, vector<2x8x32xf32>, vector<2x1x32xf32> -> vector<2x1x32xf32>
    "tpu.trace_stop"() : () -> ()
    %319 = vector.shape_cast %318 : vector<2x1x32xf32> to vector<2x32xf32>
    %320 = arith.truncf %319 : vector<2x32xf32> to vector<2x32xbf16>
    %cst_81 = arith.constant dense<0.000000e+00> : vector<2x32xf32>
    %321 = tpu.matmul %320, %289, %cst_81 {dimension_numbers = #tpu.dot_dimension_numbers<[1], [0], [0], [1], [0, 0, 1, 1], [], []>} : vector<2x32xbf16>, vector<32x32xbf16>, vector<2x32xf32> -> vector<2x32xf32>
    %322 = vector.broadcast %290 : vector<1x32xf32> to vector<2x32xf32>
    %323 = arith.addf %321, %322 : vector<2x32xf32>
    %324 = vector.shape_cast %323 : vector<2x32xf32> to vector<2x1x32xf32>
    %325 = vector.broadcast %324 : vector<2x1x32xf32> to vector<2x8x32xf32>
    %326 = arith.addf %325, %288 : vector<2x8x32xf32>
    %327 = math.tanh %326 : vector<2x8x32xf32>
    %328 = vector.broadcast %292 : vector<1x1x32xf32> to vector<2x8x32xf32>
    %329 = arith.mulf %328, %327 : vector<2x8x32xf32>
    %cst_82 = arith.constant dense<0.000000e+00> : vector<2x8xf32>
    %330 = vector.multi_reduction <add>, %329, %cst_82 [2] : vector<2x8x32xf32> to vector<2x8xf32>
    %331 = math.tanh %330 : vector<2x8xf32>
    %cst_83 = arith.constant 1.000000e+01 : f32
    %332 = vector.broadcast %cst_83 : f32 to vector<2x8xf32>
    %333 = arith.mulf %332, %331 : vector<2x8xf32>
    %cst_84 = arith.constant dense<0xFF800000> : vector<2xf32>
    %334 = vector.multi_reduction <maximumf>, %333, %cst_84 [1] : vector<2x8xf32> to vector<2xf32>
    %335 = vector.shape_cast %334 : vector<2xf32> to vector<2x1xf32>
    %336 = vector.broadcast %335 : vector<2x1xf32> to vector<2x8xf32>
    %337 = arith.subf %333, %336 : vector<2x8xf32>
    %338 = math.exp %337 : vector<2x8xf32>
    %cst_85 = arith.constant dense<0.000000e+00> : vector<2xf32>
    %339 = vector.multi_reduction <add>, %338, %cst_85 [1] : vector<2x8xf32> to vector<2xf32>
    %340 = vector.shape_cast %339 : vector<2xf32> to vector<2x1xf32>
    %341 = tpu.reciprocal %340 {approx = true} : vector<2x1xf32> -> vector<2x1xf32>
    %342 = vector.broadcast %341 : vector<2x1xf32> to vector<2x8xf32>
    %343 = arith.mulf %338, %342 : vector<2x8xf32>
    %344 = vector.shape_cast %343 : vector<2x8xf32> to vector<2x1x8xf32>
    "tpu.trace_start"() <{level = 10 : i32, message = "bqs,bsh->bqh"}> : () -> ()
    %cst_86 = arith.constant dense<0.000000e+00> : vector<2x1x32xf32>
    %345 = tpu.matmul %344, %288, %cst_86 {dimension_numbers = #tpu.dot_dimension_numbers<[2], [1], [1], [2], [0, 0, 0, 1, 1, 2], [0], [0]>} : vector<2x1x8xf32>, vector<2x8x32xf32>, vector<2x1x32xf32> -> vector<2x1x32xf32>
    "tpu.trace_stop"() : () -> ()
    %346 = vector.shape_cast %345 : vector<2x1x32xf32> to vector<2x32xf32>
    %347 = arith.truncf %346 : vector<2x32xf32> to vector<2x32xbf16>
    %cst_87 = arith.constant dense<0.000000e+00> : vector<2x32xf32>
    %348 = tpu.matmul %347, %289, %cst_87 {dimension_numbers = #tpu.dot_dimension_numbers<[1], [0], [0], [1], [0, 0, 1, 1], [], []>} : vector<2x32xbf16>, vector<32x32xbf16>, vector<2x32xf32> -> vector<2x32xf32>
    %349 = vector.broadcast %290 : vector<1x32xf32> to vector<2x32xf32>
    %350 = arith.addf %348, %349 : vector<2x32xf32>
    %351 = vector.shape_cast %350 : vector<2x32xf32> to vector<2x1x32xf32>
    %352 = vector.broadcast %351 : vector<2x1x32xf32> to vector<2x8x32xf32>
    %353 = arith.addf %352, %288 : vector<2x8x32xf32>
    %354 = math.tanh %353 : vector<2x8x32xf32>
    %355 = vector.broadcast %292 : vector<1x1x32xf32> to vector<2x8x32xf32>
    %356 = arith.mulf %355, %354 : vector<2x8x32xf32>
    %cst_88 = arith.constant dense<0.000000e+00> : vector<2x8xf32>
    %357 = vector.multi_reduction <add>, %356, %cst_88 [2] : vector<2x8x32xf32> to vector<2x8xf32>
    %358 = math.tanh %357 : vector<2x8xf32>
    %cst_89 = arith.constant 1.000000e+01 : f32
    %359 = vector.broadcast %cst_89 : f32 to vector<2x8xf32>
    %360 = arith.mulf %359, %358 : vector<2x8xf32>
    %cst_90 = arith.constant dense<0xFF800000> : vector<2xf32>
    %361 = vector.multi_reduction <maximumf>, %360, %cst_90 [1] : vector<2x8xf32> to vector<2xf32>
    %362 = vector.shape_cast %361 : vector<2xf32> to vector<2x1xf32>
    %363 = vector.broadcast %362 : vector<2x1xf32> to vector<2x8xf32>
    %364 = arith.subf %360, %363 : vector<2x8xf32>
    %365 = math.exp %364 : vector<2x8xf32>
    %cst_91 = arith.constant dense<0.000000e+00> : vector<2xf32>
    %366 = vector.multi_reduction <add>, %365, %cst_91 [1] : vector<2x8xf32> to vector<2xf32>
    %367 = vector.shape_cast %366 : vector<2xf32> to vector<2x1xf32>
    %368 = tpu.reciprocal %367 {approx = true} : vector<2x1xf32> -> vector<2x1xf32>
    %369 = vector.broadcast %368 : vector<2x1xf32> to vector<2x8xf32>
    %370 = arith.mulf %365, %369 : vector<2x8xf32>
    %371 = vector.shape_cast %370 : vector<2x8xf32> to vector<2x1x8xf32>
    "tpu.trace_start"() <{level = 10 : i32, message = "bqs,bsh->bqh"}> : () -> ()
    %cst_92 = arith.constant dense<0.000000e+00> : vector<2x1x32xf32>
    %372 = tpu.matmul %371, %288, %cst_92 {dimension_numbers = #tpu.dot_dimension_numbers<[2], [1], [1], [2], [0, 0, 0, 1, 1, 2], [0], [0]>} : vector<2x1x8xf32>, vector<2x8x32xf32>, vector<2x1x32xf32> -> vector<2x1x32xf32>
    "tpu.trace_stop"() : () -> ()
    %373 = vector.shape_cast %372 : vector<2x1x32xf32> to vector<2x32xf32>
    %374 = arith.truncf %373 : vector<2x32xf32> to vector<2x32xbf16>
    %c0_93 = arith.constant 0 : index
    %c0_94 = arith.constant 0 : index
    %375 = vector.load %arg12[%c0_93, %c0_94] : memref<32x32xbf16, #tpu.memory_space<vmem>>, vector<32x32xbf16>
    %cst_95 = arith.constant dense<0.000000e+00> : vector<2x32xf32>
    %376 = tpu.matmul %374, %375, %cst_95 {dimension_numbers = #tpu.dot_dimension_numbers<[1], [0], [0], [1], [0, 0, 1, 1], [], []>} : vector<2x32xbf16>, vector<32x32xbf16>, vector<2x32xf32> -> vector<2x32xf32>
    %c0_96 = arith.constant 0 : index
    %c0_97 = arith.constant 0 : index
    %377 = vector.load %arg13[%c0_96, %c0_97] : memref<1x32xf32, #tpu.memory_space<vmem>>, vector<1x32xf32>
    %378 = vector.broadcast %377 : vector<1x32xf32> to vector<2x32xf32>
    %379 = arith.addf %376, %378 : vector<2x32xf32>
    %cst_98 = arith.constant 0.000000e+00 : f32
    %380 = vector.broadcast %cst_98 : f32 to vector<2x32xf32>
    %381 = arith.maximumf %379, %380 : vector<2x32xf32>
    %382 = arith.truncf %381 : vector<2x32xf32> to vector<2x32xbf16>
    %c0_99 = arith.constant 0 : index
    %c0_100 = arith.constant 0 : index
    %383 = vector.load %arg14[%c0_99, %c0_100] : memref<32x1xbf16, #tpu.memory_space<vmem>>, vector<32x1xbf16>
    %cst_101 = arith.constant dense<0.000000e+00> : vector<2x1xf32>
    %384 = tpu.matmul %382, %383, %cst_101 {dimension_numbers = #tpu.dot_dimension_numbers<[1], [0], [0], [1], [0, 0, 1, 1], [], []>} : vector<2x32xbf16>, vector<32x1xbf16>, vector<2x1xf32> -> vector<2x1xf32>
    %c0_102 = arith.constant 0 : index
    %c0_103 = arith.constant 0 : index
    %385 = vector.load %arg15[%c0_102, %c0_103] : memref<1x1xf32, #tpu.memory_space<vmem>>, vector<1x1xf32>
    %386 = vector.broadcast %385 : vector<1x1xf32> to vector<2x1xf32>
    %387 = arith.addf %384, %386 : vector<2x1xf32>
    %c0_104 = arith.constant 0 : index
    %c0_105 = arith.constant 0 : index
    %388 = vector.load %arg16[%c0_104, %c0_105] : memref<2x1xf32, #tpu.memory_space<vmem>>, vector<2x1xf32>
    tpu.vector_store %arg16[%c0_104, %c0_105], %387 {strides = array<i32>} : memref<2x1xf32, #tpu.memory_space<vmem>>, vector<2x1xf32>,
    return
  }
  func.func @transform_0(%arg0: i32) -> (i32, i32, i32) {
    %c0_i32 = arith.constant 0 : i32
    %c0_i32_0 = arith.constant 0 : i32
    %c0_i32_1 = arith.constant 0 : i32
    return %arg0, %c0_i32, %c0_i32_0 : i32, i32, i32
  }
  func.func @transform_1(%arg0: i32) -> (i32, i32) {
    %c0_i32 = arith.constant 0 : i32
    %c0_i32_0 = arith.constant 0 : i32
    %c0_i32_1 = arith.constant 0 : i32
    return %c0_i32, %c0_i32_0 : i32, i32
  }
  func.func @transform_2(%arg0: i32) -> (i32, i32) {
    %c0_i32 = arith.constant 0 : i32
    %c0_i32_0 = arith.constant 0 : i32
    %c0_i32_1 = arith.constant 0 : i32
    return %c0_i32, %c0_i32_0 : i32, i32
  }
  func.func @transform_3(%arg0: i32) -> (i32, i32) {
    %c0_i32 = arith.constant 0 : i32
    %c0_i32_0 = arith.constant 0 : i32
    %c0_i32_1 = arith.constant 0 : i32
    return %c0_i32, %c0_i32_0 : i32, i32
  }
  func.func @transform_4(%arg0: i32) -> (i32, i32) {
    %c0_i32 = arith.constant 0 : i32
    %c0_i32_0 = arith.constant 0 : i32
    %c0_i32_1 = arith.constant 0 : i32
    return %c0_i32, %c0_i32_0 : i32, i32
  }
  func.func @transform_5(%arg0: i32) -> (i32, i32) {
    %c0_i32 = arith.constant 0 : i32
    %c0_i32_0 = arith.constant 0 : i32
    %c0_i32_1 = arith.constant 0 : i32
    return %c0_i32, %c0_i32_0 : i32, i32
  }
  func.func @transform_6(%arg0: i32) -> (i32, i32) {
    %c0_i32 = arith.constant 0 : i32
    %c0_i32_0 = arith.constant 0 : i32
    %c0_i32_1 = arith.constant 0 : i32
    return %c0_i32, %c0_i32_0 : i32, i32
  }
  func.func @transform_7(%arg0: i32) -> (i32, i32) {
    %c0_i32 = arith.constant 0 : i32
    %c0_i32_0 = arith.constant 0 : i32
    %c0_i32_1 = arith.constant 0 : i32
    return %c0_i32, %c0_i32_0 : i32, i32
  }
  func.func @transform_8(%arg0: i32) -> (i32, i32) {
    %c0_i32 = arith.constant 0 : i32
    %c0_i32_0 = arith.constant 0 : i32
    %c0_i32_1 = arith.constant 0 : i32
    return %c0_i32, %c0_i32_0 : i32, i32
  }
  func.func @transform_9(%arg0: i32) -> (i32, i32) {
    %c0_i32 = arith.constant 0 : i32
    %c0_i32_0 = arith.constant 0 : i32
    %c0_i32_1 = arith.constant 0 : i32
    return %c0_i32, %c0_i32_0 : i32, i32
  }
  func.func @transform_10(%arg0: i32) -> (i32, i32) {
    %c0_i32 = arith.constant 0 : i32
    %c0_i32_0 = arith.constant 0 : i32
    %c0_i32_1 = arith.constant 0 : i32
    return %c0_i32, %c0_i32_0 : i32, i32
  }
  func.func @transform_11(%arg0: i32) -> (i32, i32) {
    %c0_i32 = arith.constant 0 : i32
    %c0_i32_0 = arith.constant 0 : i32
    %c0_i32_1 = arith.constant 0 : i32
    return %c0_i32, %c0_i32_0 : i32, i32
  }
  func.func @transform_12(%arg0: i32) -> (i32, i32) {
    %c0_i32 = arith.constant 0 : i32
    %c0_i32_0 = arith.constant 0 : i32
    %c0_i32_1 = arith.constant 0 : i32
    return %c0_i32, %c0_i32_0 : i32, i32
  }
  func.func @transform_13(%arg0: i32) -> (i32, i32) {
    %c0_i32 = arith.constant 0 : i32
    %c0_i32_0 = arith.constant 0 : i32
    %c0_i32_1 = arith.constant 0 : i32
    return %c0_i32, %c0_i32_0 : i32, i32
  }
  func.func @transform_14(%arg0: i32) -> (i32, i32) {
    %c0_i32 = arith.constant 0 : i32
    %c0_i32_0 = arith.constant 0 : i32
    %c0_i32_1 = arith.constant 0 : i32
    return %c0_i32, %c0_i32_0 : i32, i32
  }
  func.func @transform_15(%arg0: i32) -> (i32, i32) {
    %c0_i32 = arith.constant 0 : i32
    %c0_i32_0 = arith.constant 0 : i32
    return %arg0, %c0_i32 : i32, i32
  }
}

</mosaic_0001>

<llo_original>
// kernel: tpu_custom_call.1
$region0: #{tpu_custom_call.1}
  #allocation0 [shape = 'u32[]', space=smem, size = 0x4, offset = 0x4, fixed_abs, tag = 'smem constant byte address 0x4 - core index']
  #allocation1 [shape = 'u32[144,128]{1,0:T(1,128)}', space=vmem, size = 0x12000, scoped, tag = 'internal scratch']
  #allocation2 [shape = 'f32[2,8,32]{2,1,0:T(8,128)}', space=vmem, size = 0x2000, scoped, tag = 'scratch operand']
  #allocation3 [shape = 'f32[1,1]{1,0:T(1,128)S(1)}', space=vmem, size = 0x200, scoped, tag = 'scoped memory for tpu_custom_call.1']
  %s0 = inlined_call_operand.vmem [shape: f32[2,8,8], index: 0, kind: input, shape index: {}]
  %s1 = inlined_call_operand.vmem [shape: f32[1,32], index: 1, kind: input, shape index: {}]
  %s2 = inlined_call_operand.hbm [shape: f32[1,32], index: 2, kind: input, shape index: {}]
  %s3 = inlined_call_operand.hbm [shape: bf16[8,128], index: 3, kind: input, shape index: {}]
  %s4 = inlined_call_operand.hbm [shape: bf16[32,128], index: 4, kind: input, shape index: {}]
  %s5 = inlined_call_operand.hbm [shape: f32[1,128], index: 5, kind: input, shape index: {}]
  %s6 = inlined_call_operand.hbm [shape: bf16[32,32], index: 6, kind: input, shape index: {}]
  %s7 = inlined_call_operand.hbm [shape: f32[1,32], index: 7, kind: input, shape index: {}]
  %s8 = inlined_call_operand.vmem [shape: bf16[32,32], index: 8, kind: input, shape index: {}]
  %s9 = inlined_call_operand.vmem [shape: f32[1,32], index: 9, kind: input, shape index: {}]
  %s10 = inlined_call_operand.vmem [shape: f32[1,32], index: 10, kind: input, shape index: {}]
  %s11 = inlined_call_operand.hbm [shape: bf16[32,32], index: 11, kind: input, shape index: {}]
  %s12 = inlined_call_operand.vmem [shape: f32[1,32], index: 12, kind: input, shape index: {}]
  %s13 = inlined_call_operand.vmem [shape: bf16[32,1], index: 13, kind: input, shape index: {}]
  %s14 = inlined_call_operand.<no memory space> [shape: f32[1,1], index: 14, kind: input, shape index: {}]
  %s15 = inlined_call_operand.vmem [shape: f32[2,1], index: 15, kind: output, shape index: {}]
  %s16 = sld [smem:[#allocation0]]
  $region98: #{tpu_custom_call.1} parent=0
    _
  %s18 = ssub.s32 1, %s16
  %s19 = scalar_select 0, %s18, %s16
  %v20 = vstv %s14
  %21 = vst [vmem:[#allocation3] sm:$0x1] %v20
  $region1: #{tpu_custom_call.1} parent=0
    #allocation4 [shape = 'u8[512]{0}', space=vmem, size = 0x400, scoped, tag = 'input window, operand 2, single buffered']
    #allocation5 [shape = 's32[1]{0}', space=sflag, size = 0x4, scoped, tag = 'scoped memory for tpu_custom_call.1']
    #allocation6 [shape = 'u8[2048]{0}', space=vmem, size = 0x800, scoped, tag = 'input window, operand 3, single buffered']
    #allocation7 [shape = 's32[1]{0}', space=sflag, size = 0x4, scoped, tag = 'scoped memory for tpu_custom_call.1']
    #allocation8 [shape = 'u8[8192]{0}', space=vmem, size = 0x2000, scoped, tag = 'input window, operand 4, single buffered']
    #allocation9 [shape = 'u8[512]{0}', space=vmem, size = 0x400, scoped, tag = 'input window, operand 5, single buffered']
    #allocation10 [shape = 's32[1]{0}', space=sflag, size = 0x4, scoped, tag = 'scoped memory for tpu_custom_call.1']
    #allocation11 [shape = 'u8[8192]{0}', space=vmem, size = 0x2000, scoped, tag = 'input window, operand 6, single buffered']
    #allocation12 [shape = 'u8[512]{0}', space=vmem, size = 0x400, scoped, tag = 'input window, operand 7, single buffered']
    #allocation13 [shape = 's32[1]{0}', space=sflag, size = 0x4, scoped, tag = 'scoped memory for tpu_custom_call.1']
    #allocation14 [shape = 'u8[8192]{0}', space=vmem, size = 0x2000, scoped, tag = 'input window, operand 11, single buffered']
    %22 = vsyncpa [#allocation5], 0
    %23 = vsyncpa [#allocation7], 0
    %24 = vsyncpa [#allocation10], 0
    %25 = vsyncpa [#allocation13], 0
    // Predicated region
    $region2: #{tpu_custom_call.1} parent=1 // pred_check
      _
    $region3: #{tpu_custom_call.1} parent=1 // pred_check_branch
      %27 = sbr.rel (0) target = $region5
    $region4: #{tpu_custom_call.1} parent=1 // pred_region
      _
    $region5: #{tpu_custom_call.1} parent=1 // pred_fallthru
      _
    // Predicated region
    $region6: #{tpu_custom_call.1} parent=1 // pred_check
      _
    $region7: #{tpu_custom_call.1} parent=1 // pred_check_branch
      %29 = sbr.rel (0) target = $region9
    $region8: #{tpu_custom_call.1} parent=1 // pred_region
      _
    $region9: #{tpu_custom_call.1} parent=1 // pred_fallthru
      _
    // Predicated region
    $region10: #{tpu_custom_call.1} parent=1 // pred_check
      _
    $region11: #{tpu_custom_call.1} parent=1 // pred_check_branch
      %31 = sbr.rel (0) target = $region13
    $region12: #{tpu_custom_call.1} parent=1 // pred_region
      %s33 = ssub.s32 16, 16
      %34 = vsyncadd [#allocation5], %s33
      %s36 = sshll.u32 [#allocation4], 4
      %s37 = int_to_ptr.vmem [resolvable:$true] %s36
      %39 = dma.hbm_to_vmem [thread:$0]  %s2, 16, %s37, [#allocation5]
    $region13: #{tpu_custom_call.1} parent=1 // pred_fallthru
      _
    // Predicated region
    $region14: #{tpu_custom_call.1} parent=1 // pred_check
      _
    $region15: #{tpu_custom_call.1} parent=1 // pred_check_branch
      %41 = sbr.rel (0) target = $region17
    $region16: #{tpu_custom_call.1} parent=1 // pred_region
      %s43 = ssub.s32 64, 64
      %44 = vsyncadd [#allocation7], %s43
      %s46 = sshll.u32 [#allocation6], 4
      %s47 = int_to_ptr.vmem [resolvable:$true] %s46
      %49 = dma.hbm_to_vmem [thread:$0]  %s3, 64, %s47, [#allocation7]
    $region17: #{tpu_custom_call.1} parent=1 // pred_fallthru
      _
    // Predicated region
    $region18: #{tpu_custom_call.1} parent=1 // pred_check
      _
    $region19: #{tpu_custom_call.1} parent=1 // pred_check_branch
      %51 = sbr.rel (0) target = $region21
    $region20: #{tpu_custom_call.1} parent=1 // pred_region
      %s53 = ssub.s32 256, 256
      %54 = vsyncadd [#allocation7], %s53
      %s55 = sshll.u32 [#allocation8], 4
      %s56 = int_to_ptr.vmem [resolvable:$true] %s55
      %61 = dma.hbm_to_vmem [thread:$0]  %s4, 256, %s56, [#allocation7], 64, 64, 4
    $region21: #{tpu_custom_call.1} parent=1 // pred_fallthru
      _
    // Predicated region
    $region22: #{tpu_custom_call.1} parent=1 // pred_check
      _
    $region23: #{tpu_custom_call.1} parent=1 // pred_check_branch
      %63 = sbr.rel (0) target = $region25
    $region24: #{tpu_custom_call.1} parent=1 // pred_region
      %s65 = ssub.s32 16, 16
      %66 = vsyncadd [#allocation10], %s65
      %s68 = sshll.u32 [#allocation9], 4
      %s69 = int_to_ptr.vmem [resolvable:$true] %s68
      %71 = dma.hbm_to_vmem [thread:$0]  %s5, 16, %s69, [#allocation10]
    $region25: #{tpu_custom_call.1} parent=1 // pred_fallthru
      _
    // Predicated region
    $region26: #{tpu_custom_call.1} parent=1 // pred_check
      _
    $region27: #{tpu_custom_call.1} parent=1 // pred_check_branch
      %73 = sbr.rel (0) target = $region29
    $region28: #{tpu_custom_call.1} parent=1 // pred_region
      %s75 = ssub.s32 256, 256
      %76 = vsyncadd [#allocation10], %s75
      %s77 = sshll.u32 [#allocation11], 4
      %s78 = int_to_ptr.vmem [resolvable:$true] %s77
      %83 = dma.hbm_to_vmem [thread:$0]  %s6, 256, %s78, [#allocation10], 64, 64, 4
    $region29: #{tpu_custom_call.1} parent=1 // pred_fallthru
      _
    // Predicated region
    $region30: #{tpu_custom_call.1} parent=1 // pred_check
      _
    $region31: #{tpu_custom_call.1} parent=1 // pred_check_branch
      %85 = sbr.rel (0) target = $region33
    $region32: #{tpu_custom_call.1} parent=1 // pred_region
      %s87 = ssub.s32 16, 16
      %88 = vsyncadd [#allocation13], %s87
      %s90 = sshll.u32 [#allocation12], 4
      %s91 = int_to_ptr.vmem [resolvable:$true] %s90
      %93 = dma.hbm_to_vmem [thread:$0]  %s7, 16, %s91, [#allocation13]
    $region33: #{tpu_custom_call.1} parent=1 // pred_fallthru
      _
    // Predicated region
    $region34: #{tpu_custom_call.1} parent=1 // pred_check
      _
    $region35: #{tpu_custom_call.1} parent=1 // pred_check_branch
      %95 = sbr.rel (0) target = $region37
    $region36: #{tpu_custom_call.1} parent=1 // pred_region
      _
    $region37: #{tpu_custom_call.1} parent=1 // pred_fallthru
      _
    // Predicated region
    $region38: #{tpu_custom_call.1} parent=1 // pred_check
      _
    $region39: #{tpu_custom_call.1} parent=1 // pred_check_branch
      %97 = sbr.rel (0) target = $region41
    $region40: #{tpu_custom_call.1} parent=1 // pred_region
      _
    $region41: #{tpu_custom_call.1} parent=1 // pred_fallthru
      _
    // Predicated region
    $region42: #{tpu_custom_call.1} parent=1 // pred_check
      _
    $region43: #{tpu_custom_call.1} parent=1 // pred_check_branch
      %99 = sbr.rel (0) target = $region45
    $region44: #{tpu_custom_call.1} parent=1 // pred_region
      _
    $region45: #{tpu_custom_call.1} parent=1 // pred_fallthru
      _
    // Predicated region
    $region46: #{tpu_custom_call.1} parent=1 // pred_check
      _
    $region47: #{tpu_custom_call.1} parent=1 // pred_check_branch
      %101 = sbr.rel (0) target = $region49
    $region48: #{tpu_custom_call.1} parent=1 // pred_region
      %s103 = ssub.s32 256, 256
      %104 = vsyncadd [#allocation13], %s103
      %s105 = sshll.u32 [#allocation14], 4
      %s106 = int_to_ptr.vmem [resolvable:$true] %s105
      %111 = dma.hbm_to_vmem [thread:$0]  %s11, 256, %s106, [#allocation13], 64, 64, 4
    $region49: #{tpu_custom_call.1} parent=1 // pred_fallthru
      _
    // Predicated region
    $region50: #{tpu_custom_call.1} parent=1 // pred_check
      _
    $region51: #{tpu_custom_call.1} parent=1 // pred_check_branch
      %113 = sbr.rel (0) target = $region53
    $region52: #{tpu_custom_call.1} parent=1 // pred_region
      _
    $region53: #{tpu_custom_call.1} parent=1 // pred_fallthru
      _
    // Predicated region
    $region54: #{tpu_custom_call.1} parent=1 // pred_check
      _
    $region55: #{tpu_custom_call.1} parent=1 // pred_check_branch
      %115 = sbr.rel (0) target = $region57
    $region56: #{tpu_custom_call.1} parent=1 // pred_region
      _
    $region57: #{tpu_custom_call.1} parent=1 // pred_fallthru
      _
    // Predicated region
    $region58: #{tpu_custom_call.1} parent=1 // pred_check
      _
    $region59: #{tpu_custom_call.1} parent=1 // pred_check_branch
      %117 = sbr.rel (0) target = $region61
    $region60: #{tpu_custom_call.1} parent=1 // pred_region
      _
    $region61: #{tpu_custom_call.1} parent=1 // pred_fallthru
      _
    // Predicated region
    $region62: #{tpu_custom_call.1} parent=1 // pred_check
      _
    $region63: #{tpu_custom_call.1} parent=1 // pred_check_branch
      %119 = sbr.rel (0) target = $region65
    $region64: #{tpu_custom_call.1} parent=1 // pred_region
      %120 = dma.done [#allocation5], 16
    $region65: #{tpu_custom_call.1} parent=1 // pred_fallthru
      _
    // Predicated region
    $region66: #{tpu_custom_call.1} parent=1 // pred_check
      _
    $region67: #{tpu_custom_call.1} parent=1 // pred_check_branch
      %122 = sbr.rel (0) target = $region69
    $region68: #{tpu_custom_call.1} parent=1 // pred_region
      %123 = dma.done [#allocation7], 64
    $region69: #{tpu_custom_call.1} parent=1 // pred_fallthru
      _
    // Predicated region
    $region70: #{tpu_custom_call.1} parent=1 // pred_check
      _
    $region71: #{tpu_custom_call.1} parent=1 // pred_check_branch
      %125 = sbr.rel (0) target = $region73
    $region72: #{tpu_custom_call.1} parent=1 // pred_region
      %126 = dma.done [#allocation7], 256
    $region73: #{tpu_custom_call.1} parent=1 // pred_fallthru
      _
    // Predicated region
    $region74: #{tpu_custom_call.1} parent=1 // pred_check
      _
    $region75: #{tpu_custom_call.1} parent=1 // pred_check_branch
      %128 = sbr.rel (0) target = $region77
    $region76: #{tpu_custom_call.1} parent=1 // pred_region
      %129 = dma.done [#allocation10], 16
    $region77: #{tpu_custom_call.1} parent=1 // pred_fallthru
      _
    // Predicated region
    $region78: #{tpu_custom_call.1} parent=1 // pred_check
      _
    $region79: #{tpu_custom_call.1} parent=1 // pred_check_branch
      %131 = sbr.rel (0) target = $region81
    $region80: #{tpu_custom_call.1} parent=1 // pred_region
      %132 = dma.done [#allocation10], 256
    $region81: #{tpu_custom_call.1} parent=1 // pred_fallthru
      _
    // Predicated region
    $region82: #{tpu_custom_call.1} parent=1 // pred_check
      _
    $region83: #{tpu_custom_call.1} parent=1 // pred_check_branch
      %134 = sbr.rel (0) target = $region85
    $region84: #{tpu_custom_call.1} parent=1 // pred_region
      %135 = dma.done [#allocation13], 16
    $region85: #{tpu_custom_call.1} parent=1 // pred_fallthru
      _
    // Predicated region
    $region86: #{tpu_custom_call.1} parent=1 // pred_check
      _
    $region87: #{tpu_custom_call.1} parent=1 // pred_check_branch
      %137 = sbr.rel (0) target = $region89
    $region88: #{tpu_custom_call.1} parent=1 // pred_region
      %138 = dma.done [#allocation13], 256
    $region89: #{tpu_custom_call.1} parent=1 // pred_fallthru
      _
    %v140 = vld [vmem:[%s0] sm:$0xff]
    %v141 = vld [vmem:[%s0 + $0x8] sm:$0xff]
    %v142 = vpack.c.bf16 %v141, %v140
    %v143 = vld [vmem:[#allocation6] sm:$0xf]
    %v144 = vld [vmem:[#allocation9] sm:$0x1]
    %v146 = vlaneseq
    %v147 = vshrl.u32 %v146, 7
    %v148 = vsub.s32 0, %v147
    %v149 = vrot.slane %v144, %v148
    %vm151 = vcmask 64512
    %v153 = vsel %vm151, %v142, 0
    %vm155 = vcmask 1043456
    %v157 = vsel %vm155, %v143, 0
    %159 = vmatprep.subr.bf16.mxu0 0
    %160 = vmatpush1.bf16.msra.mxu0 0
    %161 = vmatprep.subr.bf16.mxu0 0
    %162 = vmatpush1.bf16.msra.mxu0 0
    %163 = vmatprep.subr.bf16.mxu0 0
    %164 = vmatpush1.bf16.msra.mxu0 0
    %165 = vmatprep.subr.bf16.mxu0 0
    %166 = vmatpush1.bf16.msra.mxu0 0
    %167 = vmatprep.subr.bf16.mxu0 0
    %168 = vmatpush1.bf16.msra.mxu0 0
    %169 = vmatprep.subr.bf16.mxu0 0
    %170 = vmatpush1.bf16.msra.mxu0 0
    %171 = vmatprep.subr.bf16.mxu0 0
    %172 = vmatpush1.bf16.msra.mxu0 0
    %173 = vmatprep.subr.bf16.mxu0 0
    %174 = vmatpush1.bf16.msra.mxu0 %v157
    %175 = vmatprep.subr.bf16.mxu0 0
    %176 = vmatpush2.bf16.msra.mxu0 0
    %177 = vmatprep.subr.bf16.mxu0 0
    %178 = vmatpush2.bf16.msra.mxu0 0
    %179 = vmatprep.subr.bf16.mxu0 0
    %180 = vmatpush2.bf16.msra.mxu0 0
    %181 = vmatprep.subr.bf16.mxu0 0
    %182 = vmatpush2.bf16.msra.mxu0 0
    %183 = vmatprep.subr.bf16.mxu0 0
    %184 = vmatpush2.bf16.msra.mxu0 0
    %185 = vmatprep.subr.bf16.mxu0 0
    %186 = vmatpush2.bf16.msra.mxu0 0
    %187 = vmatprep.subr.bf16.mxu0 0
    %188 = vmatpush2.bf16.msra.mxu0 0
    %189 = vmatprep.subr.bf16.mxu0 0
    %190 = vmatpush2.bf16.msra.mxu0 0
    %191 = vmatprep.mubr.bf16.mxu0 0
    %192 = vmatmul.mubr.bf16.gmra.mxu0 %v153
    %v193 = vpop.f32.mrf.mxu0
    %v194 = vadd.f32 %v149, %v193
    %v195 = vpop.f32.mrf.mxu0
    %v196 = vpop.f32.mrf.mxu0
    %v197 = vadd.f32 %v149, %v196
    %v198 = vpop.f32.mrf.mxu0
    %199 = vdwg.mxu0
    %v200 = vld [vmem:[#allocation8] sm:$0xf]
    %v201 = vld [vmem:[#allocation8 + $0x4] sm:$0xf]
    %v202 = vld [vmem:[#allocation8 + $0x8] sm:$0xf]
    %v203 = vld [vmem:[#allocation8 + $0xc] sm:$0xf]
    %v204 = vld [vmem:[%s1] sm:$0x1]
    %v206 = vlaneseq
    %v207 = vshrl.u32 %v206, 7
    %v208 = vsub.s32 0, %v207
    %v209 = vrot.slane %v204, %v208
    %v211 = vld [vmem:[#allocation4] sm:$0x1]
    %v213 = vlaneseq
    %v214 = vshrl.u32 %v213, 7
    %v215 = vsub.s32 0, %v214
    %v216 = vrot.slane %v211, %v215
    %v217 = vpack.c.bf16 %v209, %v209
    %v222 = vunpack.c.l.b16 %v200
    %v223 = vunpack.c.l.b16 %v201
    %v224 = vunpack.c.l.b16 %v202
    %v225 = vunpack.c.l.b16 %v203
    %v226 = vpack.c.b16 %v223, %v222
    %v227 = vpack.c.b16 %v225, %v224
    %vm230 = vcmask 261120
    %v232 = vsel %vm230, %v217, 0
    %234 = vmatprep.subr.bf16.mxu0 0
    %235 = vmatpush1.bf16.msra.mxu0 0
    %236 = vmatprep.subr.bf16.mxu0 0
    %237 = vmatpush1.bf16.msra.mxu0 0
    %238 = vmatprep.subr.bf16.mxu0 0
    %239 = vmatpush1.bf16.msra.mxu0 0
    %240 = vmatprep.subr.bf16.mxu0 0
    %241 = vmatpush1.bf16.msra.mxu0 0
    %242 = vmatprep.subr.bf16.mxu0 0
    %243 = vmatpush1.bf16.msra.mxu0 0
    %244 = vmatprep.subr.bf16.mxu0 0
    %245 = vmatpush1.bf16.msra.mxu0 0
    %246 = vmatprep.subr.bf16.mxu0 0
    %247 = vmatpush1.bf16.msra.mxu0 %v227
    %248 = vmatprep.subr.bf16.mxu0 0
    %249 = vmatpush1.bf16.msra.mxu0 %v226
    %250 = vmatprep.subr.bf16.mxu0 0
    %251 = vmatpush2.bf16.msra.mxu0 0
    %252 = vmatprep.subr.bf16.mxu0 0
    %253 = vmatpush2.bf16.msra.mxu0 0
    %254 = vmatprep.subr.bf16.mxu0 0
    %255 = vmatpush2.bf16.msra.mxu0 0
    %256 = vmatprep.subr.bf16.mxu0 0
    %257 = vmatpush2.bf16.msra.mxu0 0
    %258 = vmatprep.subr.bf16.mxu0 0
    %259 = vmatpush2.bf16.msra.mxu0 0
    %260 = vmatprep.subr.bf16.mxu0 0
    %261 = vmatpush2.bf16.msra.mxu0 0
    %262 = vmatprep.subr.bf16.mxu0 0
    %263 = vmatpush2.bf16.msra.mxu0 0
    %264 = vmatprep.subr.bf16.mxu0 0
    %265 = vmatpush2.bf16.msra.mxu0 0
    %266 = vmatprep.mubr.bf16.mxu0 0
    %267 = vmatmul.mubr.bf16.gmra.mxu0 %v232
    %v268 = vpop.f32.mrf.mxu0
    %v269 = vadd.f32 0.0, %v268
    %v270 = vpop.f32.mrf.mxu0
    %v271 = vpop.f32.mrf.mxu0
    %v272 = vpop.f32.mrf.mxu0
    %273 = vdwg.mxu0
    %v275 = vrot.slane %v269, 1
    %v278 = vadd.f32 %v194, %v269
    %v279 = vadd.f32 %v197, %v275
    %v280 = vxor.u32 %v278, 2147483648
    %v281 = vxor.u32 %v279, 2147483648
    %v282 = vmul.f32 %v280, 1.442695
    %v283 = vpow.pop %v282
    %v284 = vmul.f32 %v281, 1.442695
    %v285 = vpow.pop %v284
    %v286 = vadd.f32 %v283, 1.0
    %v287 = vadd.f32 %v285, 1.0
    %v288 = vrcp.pop %v286
    %v289 = vmul.f32 1.0, %v288
    %v290 = vrcp.pop %v287
    %v291 = vmul.f32 1.0, %v290
    %v292 = vtanh.pop %v278
    %v293 = vtanh.pop %v279
    %294 = vrot.lane.b32.xlu0 %v216, 32
    %v295 = vpop.permute.xlu0 %294
    %v297 = vmul.f32 %v289, %v295
    %v298 = vmul.f32 %v291, %v295
    %301 = vrot.lane.b32.xlu0 %v292, 64
    %v302 = vpop.permute.xlu0 %301
    %303 = vrot.lane.b32.xlu0 %v293, 64
    %v304 = vpop.permute.xlu0 %303
    %v307 = vmul.f32 %v289, %v302
    %v308 = vmul.f32 %v291, %v304
    %311 = vrot.lane.b32.xlu0 %v307, 32
    %v312 = vpop.permute.xlu0 %311
    %313 = vrot.lane.b32.xlu0 %v308, 32
    %v314 = vpop.permute.xlu0 %313
    %v317 = vadd.f32 %v297, %v312
    %v318 = vadd.f32 %v298, %v314
    %v319 = vtanh.pop %v317
    %v320 = vtanh.pop %v318
    %323 = vrot.lane.b32.xlu0 %v319, 64
    %v324 = vpop.permute.xlu0 %323
    %325 = vrot.lane.b32.xlu0 %v320, 64
    %v326 = vpop.permute.xlu0 %325
    %v329 = vmul.f32 %v289, %v324
    %v330 = vmul.f32 %v291, %v326
    %333 = vrot.lane.b32.xlu0 %v329, 32
    %v334 = vpop.permute.xlu0 %333
    %335 = vrot.lane.b32.xlu0 %v330, 32
    %v336 = vpop.permute.xlu0 %335
    %vm339 = vcmask 253952
    %340 = vst.msk [vmem:[#allocation2] sm:$0x1] %vm339, %v334
    %341 = vst.msk [vmem:[#allocation2 + $0x8] sm:$0x1] %vm339, %v336
    %v342 = vpack.c.bf16 %v329, %v329
    %v343 = vpack.c.bf16 %v330, %v330
    %v346 = vunpack.c.l.b16 %v342
    %v347 = vunpack.c.l.b16 %v343
    %v348 = vrot.slane %v347, 7
    %vm349 = vcmask 1041409
    %v350 = vsel %vm349, %v348, %v346
    %v351 = vpack.c.b16 %v350, %v350
    %352 = vrot.lane.b32.xlu0 %v351, 32
    %v353 = vpop.permute.xlu0 %352
    %v355 = vsel %vm230, %v353, 0
    %357 = vmatprep.subr.bf16.mxu0 0
    %358 = vmatpush1.bf16.msra.mxu0 0
    %359 = vmatprep.subr.bf16.mxu0 0
    %360 = vmatpush1.bf16.msra.mxu0 0
    %361 = vmatprep.subr.bf16.mxu0 0
    %362 = vmatpush1.bf16.msra.mxu0 0
    %363 = vmatprep.subr.bf16.mxu0 0
    %364 = vmatpush1.bf16.msra.mxu0 0
    %365 = vmatprep.subr.bf16.mxu0 0
    %366 = vmatpush1.bf16.msra.mxu0 0
    %367 = vmatprep.subr.bf16.mxu0 0
    %368 = vmatpush1.bf16.msra.mxu0 0
    %369 = vmatprep.subr.bf16.mxu0 0
    %370 = vmatpush1.bf16.msra.mxu0 %v227
    %371 = vmatprep.subr.bf16.mxu0 0
    %372 = vmatpush1.bf16.msra.mxu0 %v226
    %373 = vmatprep.subr.bf16.mxu0 0
    %374 = vmatpush2.bf16.msra.mxu0 0
    %375 = vmatprep.subr.bf16.mxu0 0
    %376 = vmatpush2.bf16.msra.mxu0 0
    %377 = vmatprep.subr.bf16.mxu0 0
    %378 = vmatpush2.bf16.msra.mxu0 0
    %379 = vmatprep.subr.bf16.mxu0 0
    %380 = vmatpush2.bf16.msra.mxu0 0
    %381 = vmatprep.subr.bf16.mxu0 0
    %382 = vmatpush2.bf16.msra.mxu0 0
    %383 = vmatprep.subr.bf16.mxu0 0
    %384 = vmatpush2.bf16.msra.mxu0 0
    %385 = vmatprep.subr.bf16.mxu0 0
    %386 = vmatpush2.bf16.msra.mxu0 0
    %387 = vmatprep.subr.bf16.mxu0 0
    %388 = vmatpush2.bf16.msra.mxu0 0
    %389 = vmatprep.mubr.bf16.mxu0 0
    %390 = vmatmul.mubr.bf16.gmra.mxu0 %v355
    %v391 = vpop.f32.mrf.mxu0
    %v392 = vadd.f32 0.0, %v391
    %v393 = vpop.f32.mrf.mxu0
    %v394 = vpop.f32.mrf.mxu0
    %v395 = vpop.f32.mrf.mxu0
    %396 = vdwg.mxu0
    %v398 = vrot.slane %v392, 7
    %v401 = vadd.f32 %v194, %v398
    %v402 = vadd.f32 %v197, %v392
    %v403 = vxor.u32 %v401, 2147483648
    %v404 = vxor.u32 %v402, 2147483648
    %v405 = vmul.f32 %v403, 1.442695
    %v406 = vpow.pop %v405
    %v407 = vmul.f32 %v404, 1.442695
    %v408 = vpow.pop %v407
    %v409 = vadd.f32 %v406, 1.0
    %v410 = vadd.f32 %v408, 1.0
    %v411 = vrcp.pop %v409
    %v412 = vmul.f32 1.0, %v411
    %v413 = vrcp.pop %v410
    %v414 = vmul.f32 1.0, %v413
    %v415 = vtanh.pop %v401
    %v416 = vtanh.pop %v402
    %v419 = vrot.slane %v317, 7
    %v420 = vrot.slane %v318, 7
    %v423 = vmul.f32 %v412, %v419
    %v424 = vmul.f32 %v414, %v420
    %427 = vrot.lane.b32.xlu0 %v415, 64
    %v428 = vpop.permute.xlu0 %427
    %429 = vrot.lane.b32.xlu0 %v416, 64
    %v430 = vpop.permute.xlu0 %429
    %v433 = vmul.f32 %v412, %v428
    %v434 = vmul.f32 %v414, %v430
    %437 = vrot.lane.b32.xlu0 %v433, 32
    %v438 = vpop.permute.xlu0 %437
    %439 = vrot.lane.b32.xlu0 %v434, 32
    %v440 = vpop.permute.xlu0 %439
    %v443 = vadd.f32 %v423, %v438
    %v444 = vadd.f32 %v424, %v440
    %v445 = vtanh.pop %v443
    %v446 = vtanh.pop %v444
    %449 = vrot.lane.b32.xlu0 %v445, 64
    %v450 = vpop.permute.xlu0 %449
    %451 = vrot.lane.b32.xlu0 %v446, 64
    %v452 = vpop.permute.xlu0 %451
    %v455 = vmul.f32 %v412, %v450
    %v456 = vmul.f32 %v414, %v452
    %459 = vrot.lane.b32.xlu0 %v455, 32
    %v460 = vpop.permute.xlu0 %459
    %461 = vrot.lane.b32.xlu0 %v456, 32
    %v462 = vpop.permute.xlu0 %461
    %vm465 = vcmask 254977
    %466 = vst.msk [vmem:[#allocation2] sm:$0x2] %vm465, %v460
    %467 = vst.msk [vmem:[#allocation2 + $0x8] sm:$0x2] %vm465, %v462
    %v468 = vpack.c.bf16 %v455, %v455
    %v469 = vpack.c.bf16 %v456, %v456
    %v472 = vunpack.c.l.b16 %v468
    %v473 = vunpack.c.l.b16 %v469
    %v474 = vrot.slane %v472, 1
    %v475 = vsel %vm349, %v473, %v474
    %v476 = vpack.c.b16 %v475, %v475
    %477 = vrot.lane.b32.xlu0 %v476, 32
    %v478 = vpop.permute.xlu0 %477
    %v480 = vsel %vm230, %v478, 0
    %482 = vmatprep.subr.bf16.mxu0 0
    %483 = vmatpush1.bf16.msra.mxu0 0
    %484 = vmatprep.subr.bf16.mxu0 0
    %485 = vmatpush1.bf16.msra.mxu0 0
    %486 = vmatprep.subr.bf16.mxu0 0
    %487 = vmatpush1.bf16.msra.mxu0 0
    %488 = vmatprep.subr.bf16.mxu0 0
    %489 = vmatpush1.bf16.msra.mxu0 0
    %490 = vmatprep.subr.bf16.mxu0 0
    %491 = vmatpush1.bf16.msra.mxu0 0
    %492 = vmatprep.subr.bf16.mxu0 0
    %493 = vmatpush1.bf16.msra.mxu0 0
    %494 = vmatprep.subr.bf16.mxu0 0
    %495 = vmatpush1.bf16.msra.mxu0 %v227
    %496 = vmatprep.subr.bf16.mxu0 0
    %497 = vmatpush1.bf16.msra.mxu0 %v226
    %498 = vmatprep.subr.bf16.mxu0 0
    %499 = vmatpush2.bf16.msra.mxu0 0
    %500 = vmatprep.subr.bf16.mxu0 0
    %501 = vmatpush2.bf16.msra.mxu0 0
    %502 = vmatprep.subr.bf16.mxu0 0
    %503 = vmatpush2.bf16.msra.mxu0 0
    %504 = vmatprep.subr.bf16.mxu0 0
    %505 = vmatpush2.bf16.msra.mxu0 0
    %506 = vmatprep.subr.bf16.mxu0 0
    %507 = vmatpush2.bf16.msra.mxu0 0
    %508 = vmatprep.subr.bf16.mxu0 0
    %509 = vmatpush2.bf16.msra.mxu0 0
    %510 = vmatprep.subr.bf16.mxu0 0
    %511 = vmatpush2.bf16.msra.mxu0 0
    %512 = vmatprep.subr.bf16.mxu0 0
    %513 = vmatpush2.bf16.msra.mxu0 0
    %514 = vmatprep.mubr.bf16.mxu0 0
    %515 = vmatmul.mubr.bf16.gmra.mxu0 %v480
    %v516 = vpop.f32.mrf.mxu0
    %v517 = vadd.f32 0.0, %v516
    %v518 = vpop.f32.mrf.mxu0
    %v519 = vpop.f32.mrf.mxu0
    %v520 = vpop.f32.mrf.mxu0
    %521 = vdwg.mxu0
    %v523 = vrot.slane %v517, 6
    %v524 = vrot.slane %v517, 7
    %v527 = vadd.f32 %v194, %v523
    %v528 = vadd.f32 %v197, %v524
    %v529 = vxor.u32 %v527, 2147483648
    %v530 = vxor.u32 %v528, 2147483648
    %v531 = vmul.f32 %v529, 1.442695
    %v532 = vpow.pop %v531
    %v533 = vmul.f32 %v530, 1.442695
    %v534 = vpow.pop %v533
    %v535 = vadd.f32 %v532, 1.0
    %v536 = vadd.f32 %v534, 1.0
    %v537 = vrcp.pop %v535
    %v538 = vmul.f32 1.0, %v537
    %v539 = vrcp.pop %v536
    %v540 = vmul.f32 1.0, %v539
    %v541 = vtanh.pop %v527
    %v542 = vtanh.pop %v528
    %v545 = vrot.slane %v443, 7
    %v546 = vrot.slane %v444, 7
    %v549 = vmul.f32 %v538, %v545
    %v550 = vmul.f32 %v540, %v546
    %553 = vrot.lane.b32.xlu0 %v541, 64
    %v554 = vpop.permute.xlu0 %553
    %555 = vrot.lane.b32.xlu0 %v542, 64
    %v556 = vpop.permute.xlu0 %555
    %v559 = vmul.f32 %v538, %v554
    %v560 = vmul.f32 %v540, %v556
    %563 = vrot.lane.b32.xlu0 %v559, 32
    %v564 = vpop.permute.xlu0 %563
    %565 = vrot.lane.b32.xlu0 %v560, 32
    %v566 = vpop.permute.xlu0 %565
    %v569 = vadd.f32 %v549, %v564
    %v570 = vadd.f32 %v550, %v566
    %v571 = vtanh.pop %v569
    %v572 = vtanh.pop %v570
    %575 = vrot.lane.b32.xlu0 %v571, 64
    %v576 = vpop.permute.xlu0 %575
    %577 = vrot.lane.b32.xlu0 %v572, 64
    %v578 = vpop.permute.xlu0 %577
    %v581 = vmul.f32 %v538, %v576
    %v582 = vmul.f32 %v540, %v578
    %585 = vrot.lane.b32.xlu0 %v581, 32
    %v586 = vpop.permute.xlu0 %585
    %587 = vrot.lane.b32.xlu0 %v582, 32
    %v588 = vpop.permute.xlu0 %587
    %vm591 = vcmask 256002
    %592 = vst.msk [vmem:[#allocation2] sm:$0x4] %vm591, %v586
    %593 = vst.msk [vmem:[#allocation2 + $0x8] sm:$0x4] %vm591, %v588
    %v594 = vpack.c.bf16 %v581, %v581
    %v595 = vpack.c.bf16 %v582, %v582
    %v598 = vunpack.c.l.b16 %v594
    %v599 = vunpack.c.l.b16 %v595
    %v600 = vrot.slane %v598, 2
    %v601 = vrot.slane %v599, 1
    %v602 = vsel %vm349, %v601, %v600
    %v603 = vpack.c.b16 %v602, %v602
    %604 = vrot.lane.b32.xlu0 %v603, 32
    %v605 = vpop.permute.xlu0 %604
    %v607 = vsel %vm230, %v605, 0
    %609 = vmatprep.subr.bf16.mxu0 0
    %610 = vmatpush1.bf16.msra.mxu0 0
    %611 = vmatprep.subr.bf16.mxu0 0
    %612 = vmatpush1.bf16.msra.mxu0 0
    %613 = vmatprep.subr.bf16.mxu0 0
    %614 = vmatpush1.bf16.msra.mxu0 0
    %615 = vmatprep.subr.bf16.mxu0 0
    %616 = vmatpush1.bf16.msra.mxu0 0
    %617 = vmatprep.subr.bf16.mxu0 0
    %618 = vmatpush1.bf16.msra.mxu0 0
    %619 = vmatprep.subr.bf16.mxu0 0
    %620 = vmatpush1.bf16.msra.mxu0 0
    %621 = vmatprep.subr.bf16.mxu0 0
    %622 = vmatpush1.bf16.msra.mxu0 %v227
    %623 = vmatprep.subr.bf16.mxu0 0
    %624 = vmatpush1.bf16.msra.mxu0 %v226
    %625 = vmatprep.subr.bf16.mxu0 0
    %626 = vmatpush2.bf16.msra.mxu0 0
    %627 = vmatprep.subr.bf16.mxu0 0
    %628 = vmatpush2.bf16.msra.mxu0 0
    %629 = vmatprep.subr.bf16.mxu0 0
    %630 = vmatpush2.bf16.msra.mxu0 0
    %631 = vmatprep.subr.bf16.mxu0 0
    %632 = vmatpush2.bf16.msra.mxu0 0
    %633 = vmatprep.subr.bf16.mxu0 0
    %634 = vmatpush2.bf16.msra.mxu0 0
    %635 = vmatprep.subr.bf16.mxu0 0
    %636 = vmatpush2.bf16.msra.mxu0 0
    %637 = vmatprep.subr.bf16.mxu0 0
    %638 = vmatpush2.bf16.msra.mxu0 0
    %639 = vmatprep.subr.bf16.mxu0 0
    %640 = vmatpush2.bf16.msra.mxu0 0
    %641 = vmatprep.mubr.bf16.mxu0 0
    %642 = vmatmul.mubr.bf16.gmra.mxu0 %v607
    %v643 = vpop.f32.mrf.mxu0
    %v644 = vadd.f32 0.0, %v643
    %v645 = vpop.f32.mrf.mxu0
    %v646 = vpop.f32.mrf.mxu0
    %v647 = vpop.f32.mrf.mxu0
    %648 = vdwg.mxu0
    %v650 = vrot.slane %v644, 5
    %v651 = vrot.slane %v644, 6
    %v654 = vadd.f32 %v194, %v650
    %v655 = vadd.f32 %v197, %v651
    %v656 = vxor.u32 %v654, 2147483648
    %v657 = vxor.u32 %v655, 2147483648
    %v658 = vmul.f32 %v656, 1.442695
    %v659 = vpow.pop %v658
    %v660 = vmul.f32 %v657, 1.442695
    %v661 = vpow.pop %v660
    %v662 = vadd.f32 %v659, 1.0
    %v663 = vadd.f32 %v661, 1.0
    %v664 = vrcp.pop %v662
    %v665 = vmul.f32 1.0, %v664
    %v666 = vrcp.pop %v663
    %v667 = vmul.f32 1.0, %v666
    %v668 = vtanh.pop %v654
    %v669 = vtanh.pop %v655
    %v672 = vrot.slane %v569, 7
    %v673 = vrot.slane %v570, 7
    %v676 = vmul.f32 %v665, %v672
    %v677 = vmul.f32 %v667, %v673
    %680 = vrot.lane.b32.xlu0 %v668, 64
    %v681 = vpop.permute.xlu0 %680
    %682 = vrot.lane.b32.xlu0 %v669, 64
    %v683 = vpop.permute.xlu0 %682
    %v686 = vmul.f32 %v665, %v681
    %v687 = vmul.f32 %v667, %v683
    %690 = vrot.lane.b32.xlu0 %v686, 32
    %v691 = vpop.permute.xlu0 %690
    %692 = vrot.lane.b32.xlu0 %v687, 32
    %v693 = vpop.permute.xlu0 %692
    %v696 = vadd.f32 %v676, %v691
    %v697 = vadd.f32 %v677, %v693
    %v698 = vtanh.pop %v696
    %v699 = vtanh.pop %v697
    %702 = vrot.lane.b32.xlu0 %v698, 64
    %v703 = vpop.permute.xlu0 %702
    %704 = vrot.lane.b32.xlu0 %v699, 64
    %v705 = vpop.permute.xlu0 %704
    %v708 = vmul.f32 %v665, %v703
    %v709 = vmul.f32 %v667, %v705
    %712 = vrot.lane.b32.xlu0 %v708, 32
    %v713 = vpop.permute.xlu0 %712
    %714 = vrot.lane.b32.xlu0 %v709, 32
    %v715 = vpop.permute.xlu0 %714
    %vm718 = vcmask 257027
    %719 = vst.msk [vmem:[#allocation2] sm:$0x8] %vm718, %v713
    %720 = vst.msk [vmem:[#allocation2 + $0x8] sm:$0x8] %vm718, %v715
    %v721 = vpack.c.bf16 %v708, %v708
    %v722 = vpack.c.bf16 %v709, %v709
    %v725 = vunpack.c.l.b16 %v721
    %v726 = vunpack.c.l.b16 %v722
    %v727 = vrot.slane %v725, 3
    %v728 = vrot.slane %v726, 2
    %v729 = vsel %vm349, %v728, %v727
    %v730 = vpack.c.b16 %v729, %v729
    %731 = vrot.lane.b32.xlu0 %v730, 32
    %v732 = vpop.permute.xlu0 %731
    %v734 = vsel %vm230, %v732, 0
    %736 = vmatprep.subr.bf16.mxu0 0
    %737 = vmatpush1.bf16.msra.mxu0 0
    %738 = vmatprep.subr.bf16.mxu0 0
    %739 = vmatpush1.bf16.msra.mxu0 0
    %740 = vmatprep.subr.bf16.mxu0 0
    %741 = vmatpush1.bf16.msra.mxu0 0
    %742 = vmatprep.subr.bf16.mxu0 0
    %743 = vmatpush1.bf16.msra.mxu0 0
    %744 = vmatprep.subr.bf16.mxu0 0
    %745 = vmatpush1.bf16.msra.mxu0 0
    %746 = vmatprep.subr.bf16.mxu0 0
    %747 = vmatpush1.bf16.msra.mxu0 0
    %748 = vmatprep.subr.bf16.mxu0 0
    %749 = vmatpush1.bf16.msra.mxu0 %v227
    %750 = vmatprep.subr.bf16.mxu0 0
    %751 = vmatpush1.bf16.msra.mxu0 %v226
    %752 = vmatprep.subr.bf16.mxu0 0
    %753 = vmatpush2.bf16.msra.mxu0 0
    %754 = vmatprep.subr.bf16.mxu0 0
    %755 = vmatpush2.bf16.msra.mxu0 0
    %756 = vmatprep.subr.bf16.mxu0 0
    %757 = vmatpush2.bf16.msra.mxu0 0
    %758 = vmatprep.subr.bf16.mxu0 0
    %759 = vmatpush2.bf16.msra.mxu0 0
    %760 = vmatprep.subr.bf16.mxu0 0
    %761 = vmatpush2.bf16.msra.mxu0 0
    %762 = vmatprep.subr.bf16.mxu0 0
    %763 = vmatpush2.bf16.msra.mxu0 0
    %764 = vmatprep.subr.bf16.mxu0 0
    %765 = vmatpush2.bf16.msra.mxu0 0
    %766 = vmatprep.subr.bf16.mxu0 0
    %767 = vmatpush2.bf16.msra.mxu0 0
    %768 = vmatprep.mubr.bf16.mxu0 0
    %769 = vmatmul.mubr.bf16.gmra.mxu0 %v734
    %v770 = vpop.f32.mrf.mxu0
    %v771 = vadd.f32 0.0, %v770
    %v772 = vpop.f32.mrf.mxu0
    %v773 = vpop.f32.mrf.mxu0
    %v774 = vpop.f32.mrf.mxu0
    %775 = vdwg.mxu0
    %v777 = vrot.slane %v771, 4
    %v778 = vrot.slane %v771, 5
    %v781 = vadd.f32 %v194, %v777
    %v782 = vadd.f32 %v197, %v778
    %v783 = vxor.u32 %v781, 2147483648
    %v784 = vxor.u32 %v782, 2147483648
    %v785 = vmul.f32 %v783, 1.442695
    %v786 = vpow.pop %v785
    %v787 = vmul.f32 %v784, 1.442695
    %v788 = vpow.pop %v787
    %v789 = vadd.f32 %v786, 1.0
    %v790 = vadd.f32 %v788, 1.0
    %v791 = vrcp.pop %v789
    %v792 = vmul.f32 1.0, %v791
    %v793 = vrcp.pop %v790
    %v794 = vmul.f32 1.0, %v793
    %v795 = vtanh.pop %v781
    %v796 = vtanh.pop %v782
    %v799 = vrot.slane %v696, 7
    %v800 = vrot.slane %v697, 7
    %v803 = vmul.f32 %v792, %v799
    %v804 = vmul.f32 %v794, %v800
    %807 = vrot.lane.b32.xlu0 %v795, 64
    %v808 = vpop.permute.xlu0 %807
    %809 = vrot.lane.b32.xlu0 %v796, 64
    %v810 = vpop.permute.xlu0 %809
    %v813 = vmul.f32 %v792, %v808
    %v814 = vmul.f32 %v794, %v810
    %817 = vrot.lane.b32.xlu0 %v813, 32
    %v818 = vpop.permute.xlu0 %817
    %819 = vrot.lane.b32.xlu0 %v814, 32
    %v820 = vpop.permute.xlu0 %819
    %v823 = vadd.f32 %v803, %v818
    %v824 = vadd.f32 %v804, %v820
    %v825 = vtanh.pop %v823
    %v826 = vtanh.pop %v824
    %829 = vrot.lane.b32.xlu0 %v825, 64
    %v830 = vpop.permute.xlu0 %829
    %831 = vrot.lane.b32.xlu0 %v826, 64
    %v832 = vpop.permute.xlu0 %831
    %v835 = vmul.f32 %v792, %v830
    %v836 = vmul.f32 %v794, %v832
    %839 = vrot.lane.b32.xlu0 %v835, 32
    %v840 = vpop.permute.xlu0 %839
    %841 = vrot.lane.b32.xlu0 %v836, 32
    %v842 = vpop.permute.xlu0 %841
    %vm845 = vcmask 258052
    %846 = vst.msk [vmem:[#allocation2] sm:$0x10] %vm845, %v840
    %847 = vst.msk [vmem:[#allocation2 + $0x8] sm:$0x10] %vm845, %v842
    %v848 = vpack.c.bf16 %v835, %v835
    %v849 = vpack.c.bf16 %v836, %v836
    %v852 = vunpack.c.l.b16 %v848
    %v853 = vunpack.c.l.b16 %v849
    %v854 = vrot.slane %v852, 4
    %v855 = vrot.slane %v853, 3
    %v856 = vsel %vm349, %v855, %v854
    %v857 = vpack.c.b16 %v856, %v856
    %858 = vrot.lane.b32.xlu0 %v857, 32
    %v859 = vpop.permute.xlu0 %858
    %v861 = vsel %vm230, %v859, 0
    %863 = vmatprep.subr.bf16.mxu0 0
    %864 = vmatpush1.bf16.msra.mxu0 0
    %865 = vmatprep.subr.bf16.mxu0 0
    %866 = vmatpush1.bf16.msra.mxu0 0
    %867 = vmatprep.subr.bf16.mxu0 0
    %868 = vmatpush1.bf16.msra.mxu0 0
    %869 = vmatprep.subr.bf16.mxu0 0
    %870 = vmatpush1.bf16.msra.mxu0 0
    %871 = vmatprep.subr.bf16.mxu0 0
    %872 = vmatpush1.bf16.msra.mxu0 0
    %873 = vmatprep.subr.bf16.mxu0 0
    %874 = vmatpush1.bf16.msra.mxu0 0
    %875 = vmatprep.subr.bf16.mxu0 0
    %876 = vmatpush1.bf16.msra.mxu0 %v227
    %877 = vmatprep.subr.bf16.mxu0 0
    %878 = vmatpush1.bf16.msra.mxu0 %v226
    %879 = vmatprep.subr.bf16.mxu0 0
    %880 = vmatpush2.bf16.msra.mxu0 0
    %881 = vmatprep.subr.bf16.mxu0 0
    %882 = vmatpush2.bf16.msra.mxu0 0
    %883 = vmatprep.subr.bf16.mxu0 0
    %884 = vmatpush2.bf16.msra.mxu0 0
    %885 = vmatprep.subr.bf16.mxu0 0
    %886 = vmatpush2.bf16.msra.mxu0 0
    %887 = vmatprep.subr.bf16.mxu0 0
    %888 = vmatpush2.bf16.msra.mxu0 0
    %889 = vmatprep.subr.bf16.mxu0 0
    %890 = vmatpush2.bf16.msra.mxu0 0
    %891 = vmatprep.subr.bf16.mxu0 0
    %892 = vmatpush2.bf16.msra.mxu0 0
    %893 = vmatprep.subr.bf16.mxu0 0
    %894 = vmatpush2.bf16.msra.mxu0 0
    %895 = vmatprep.mubr.bf16.mxu0 0
    %896 = vmatmul.mubr.bf16.gmra.mxu0 %v861
    %v897 = vpop.f32.mrf.mxu0
    %v898 = vadd.f32 0.0, %v897
    %v899 = vpop.f32.mrf.mxu0
    %v900 = vpop.f32.mrf.mxu0
    %v901 = vpop.f32.mrf.mxu0
    %902 = vdwg.mxu0
    %v904 = vrot.slane %v898, 3
    %v905 = vrot.slane %v898, 4
    %v908 = vadd.f32 %v194, %v904
    %v909 = vadd.f32 %v197, %v905
    %v910 = vxor.u32 %v908, 2147483648
    %v911 = vxor.u32 %v909, 2147483648
    %v912 = vmul.f32 %v910, 1.442695
    %v913 = vpow.pop %v912
    %v914 = vmul.f32 %v911, 1.442695
    %v915 = vpow.pop %v914
    %v916 = vadd.f32 %v913, 1.0
    %v917 = vadd.f32 %v915, 1.0
    %v918 = vrcp.pop %v916
    %v919 = vmul.f32 1.0, %v918
    %v920 = vrcp.pop %v917
    %v921 = vmul.f32 1.0, %v920
    %v922 = vtanh.pop %v908
    %v923 = vtanh.pop %v909
    %v926 = vrot.slane %v823, 7
    %v927 = vrot.slane %v824, 7
    %v930 = vmul.f32 %v919, %v926
    %v931 = vmul.f32 %v921, %v927
    %934 = vrot.lane.b32.xlu0 %v922, 64
    %v935 = vpop.permute.xlu0 %934
    %936 = vrot.lane.b32.xlu0 %v923, 64
    %v937 = vpop.permute.xlu0 %936
    %v940 = vmul.f32 %v919, %v935
    %v941 = vmul.f32 %v921, %v937
    %944 = vrot.lane.b32.xlu0 %v940, 32
    %v945 = vpop.permute.xlu0 %944
    %946 = vrot.lane.b32.xlu0 %v941, 32
    %v947 = vpop.permute.xlu0 %946
    %v950 = vadd.f32 %v930, %v945
    %v951 = vadd.f32 %v931, %v947
    %v952 = vtanh.pop %v950
    %v953 = vtanh.pop %v951
    %956 = vrot.lane.b32.xlu0 %v952, 64
    %v957 = vpop.permute.xlu0 %956
    %958 = vrot.lane.b32.xlu0 %v953, 64
    %v959 = vpop.permute.xlu0 %958
    %v962 = vmul.f32 %v919, %v957
    %v963 = vmul.f32 %v921, %v959
    %966 = vrot.lane.b32.xlu0 %v962, 32
    %v967 = vpop.permute.xlu0 %966
    %968 = vrot.lane.b32.xlu0 %v963, 32
    %v969 = vpop.permute.xlu0 %968
    %vm972 = vcmask 259077
    %973 = vst.msk [vmem:[#allocation2] sm:$0x20] %vm972, %v967
    %974 = vst.msk [vmem:[#allocation2 + $0x8] sm:$0x20] %vm972, %v969
    %v975 = vpack.c.bf16 %v962, %v962
    %v976 = vpack.c.bf16 %v963, %v963
    %v979 = vunpack.c.l.b16 %v975
    %v980 = vunpack.c.l.b16 %v976
    %v981 = vrot.slane %v979, 5
    %v982 = vrot.slane %v980, 4
    %v983 = vsel %vm349, %v982, %v981
    %v984 = vpack.c.b16 %v983, %v983
    %985 = vrot.lane.b32.xlu0 %v984, 32
    %v986 = vpop.permute.xlu0 %985
    %v988 = vsel %vm230, %v986, 0
    %990 = vmatprep.subr.bf16.mxu0 0
    %991 = vmatpush1.bf16.msra.mxu0 0
    %992 = vmatprep.subr.bf16.mxu0 0
    %993 = vmatpush1.bf16.msra.mxu0 0
    %994 = vmatprep.subr.bf16.mxu0 0
    %995 = vmatpush1.bf16.msra.mxu0 0
    %996 = vmatprep.subr.bf16.mxu0 0
    %997 = vmatpush1.bf16.msra.mxu0 0
    %998 = vmatprep.subr.bf16.mxu0 0
    %999 = vmatpush1.bf16.msra.mxu0 0
    %1000 = vmatprep.subr.bf16.mxu0 0
    %1001 = vmatpush1.bf16.msra.mxu0 0
    %1002 = vmatprep.subr.bf16.mxu0 0
    %1003 = vmatpush1.bf16.msra.mxu0 %v227
    %1004 = vmatprep.subr.bf16.mxu0 0
    %1005 = vmatpush1.bf16.msra.mxu0 %v226
    %1006 = vmatprep.subr.bf16.mxu0 0
    %1007 = vmatpush2.bf16.msra.mxu0 0
    %1008 = vmatprep.subr.bf16.mxu0 0
    %1009 = vmatpush2.bf16.msra.mxu0 0
    %1010 = vmatprep.subr.bf16.mxu0 0
    %1011 = vmatpush2.bf16.msra.mxu0 0
    %1012 = vmatprep.subr.bf16.mxu0 0
    %1013 = vmatpush2.bf16.msra.mxu0 0
    %1014 = vmatprep.subr.bf16.mxu0 0
    %1015 = vmatpush2.bf16.msra.mxu0 0
    %1016 = vmatprep.subr.bf16.mxu0 0
    %1017 = vmatpush2.bf16.msra.mxu0 0
    %1018 = vmatprep.subr.bf16.mxu0 0
    %1019 = vmatpush2.bf16.msra.mxu0 0
    %1020 = vmatprep.subr.bf16.mxu0 0
    %1021 = vmatpush2.bf16.msra.mxu0 0
    %1022 = vmatprep.mubr.bf16.mxu0 0
    %1023 = vmatmul.mubr.bf16.gmra.mxu0 %v988
    %v1024 = vpop.f32.mrf.mxu0
    %v1025 = vadd.f32 0.0, %v1024
    %v1026 = vpop.f32.mrf.mxu0
    %v1027 = vpop.f32.mrf.mxu0
    %v1028 = vpop.f32.mrf.mxu0
    %1029 = vdwg.mxu0
    %v1031 = vrot.slane %v1025, 2
    %v1032 = vrot.slane %v1025, 3
    %v1035 = vadd.f32 %v194, %v1031
    %v1036 = vadd.f32 %v197, %v1032
    %v1037 = vxor.u32 %v1035, 2147483648
    %v1038 = vxor.u32 %v1036, 2147483648
    %v1039 = vmul.f32 %v1037, 1.442695
    %v1040 = vpow.pop %v1039
    %v1041 = vmul.f32 %v1038, 1.442695
    %v1042 = vpow.pop %v1041
    %v1043 = vadd.f32 %v1040, 1.0
    %v1044 = vadd.f32 %v1042, 1.0
    %v1045 = vrcp.pop %v1043
    %v1046 = vmul.f32 1.0, %v1045
    %v1047 = vrcp.pop %v1044
    %v1048 = vmul.f32 1.0, %v1047
    %v1049 = vtanh.pop %v1035
    %v1050 = vtanh.pop %v1036
    %v1053 = vrot.slane %v950, 7
    %v1054 = vrot.slane %v951, 7
    %v1057 = vmul.f32 %v1046, %v1053
    %v1058 = vmul.f32 %v1048, %v1054
    %1061 = vrot.lane.b32.xlu0 %v1049, 64
    %v1062 = vpop.permute.xlu0 %1061
    %1063 = vrot.lane.b32.xlu0 %v1050, 64
    %v1064 = vpop.permute.xlu0 %1063
    %v1067 = vmul.f32 %v1046, %v1062
    %v1068 = vmul.f32 %v1048, %v1064
    %1071 = vrot.lane.b32.xlu0 %v1067, 32
    %v1072 = vpop.permute.xlu0 %1071
    %1073 = vrot.lane.b32.xlu0 %v1068, 32
    %v1074 = vpop.permute.xlu0 %1073
    %v1077 = vadd.f32 %v1057, %v1072
    %v1078 = vadd.f32 %v1058, %v1074
    %v1079 = vtanh.pop %v1077
    %v1080 = vtanh.pop %v1078
    %1083 = vrot.lane.b32.xlu0 %v1079, 64
    %v1084 = vpop.permute.xlu0 %1083
    %1085 = vrot.lane.b32.xlu0 %v1080, 64
    %v1086 = vpop.permute.xlu0 %1085
    %v1089 = vmul.f32 %v1046, %v1084
    %v1090 = vmul.f32 %v1048, %v1086
    %1093 = vrot.lane.b32.xlu0 %v1089, 32
    %v1094 = vpop.permute.xlu0 %1093
    %1095 = vrot.lane.b32.xlu0 %v1090, 32
    %v1096 = vpop.permute.xlu0 %1095
    %vm1099 = vcmask 260102
    %1100 = vst.msk [vmem:[#allocation2] sm:$0x40] %vm1099, %v1094
    %1101 = vst.msk [vmem:[#allocation2 + $0x8] sm:$0x40] %vm1099, %v1096
    %v1102 = vpack.c.bf16 %v1089, %v1089
    %v1103 = vpack.c.bf16 %v1090, %v1090
    %v1106 = vunpack.c.l.b16 %v1102
    %v1107 = vunpack.c.l.b16 %v1103
    %v1108 = vrot.slane %v1106, 6
    %v1109 = vrot.slane %v1107, 5
    %v1110 = vsel %vm349, %v1109, %v1108
    %v1111 = vpack.c.b16 %v1110, %v1110
    %1112 = vrot.lane.b32.xlu0 %v1111, 32
    %v1113 = vpop.permute.xlu0 %1112
    %v1115 = vsel %vm230, %v1113, 0
    %1117 = vmatprep.subr.bf16.mxu0 0
    %1118 = vmatpush1.bf16.msra.mxu0 0
    %1119 = vmatprep.subr.bf16.mxu0 0
    %1120 = vmatpush1.bf16.msra.mxu0 0
    %1121 = vmatprep.subr.bf16.mxu0 0
    %1122 = vmatpush1.bf16.msra.mxu0 0
    %1123 = vmatprep.subr.bf16.mxu0 0
    %1124 = vmatpush1.bf16.msra.mxu0 0
    %1125 = vmatprep.subr.bf16.mxu0 0
    %1126 = vmatpush1.bf16.msra.mxu0 0
    %1127 = vmatprep.subr.bf16.mxu0 0
    %1128 = vmatpush1.bf16.msra.mxu0 0
    %1129 = vmatprep.subr.bf16.mxu0 0
    %1130 = vmatpush1.bf16.msra.mxu0 %v227
    %1131 = vmatprep.subr.bf16.mxu0 0
    %1132 = vmatpush1.bf16.msra.mxu0 %v226
    %1133 = vmatprep.subr.bf16.mxu0 0
    %1134 = vmatpush2.bf16.msra.mxu0 0
    %1135 = vmatprep.subr.bf16.mxu0 0
    %1136 = vmatpush2.bf16.msra.mxu0 0
    %1137 = vmatprep.subr.bf16.mxu0 0
    %1138 = vmatpush2.bf16.msra.mxu0 0
    %1139 = vmatprep.subr.bf16.mxu0 0
    %1140 = vmatpush2.bf16.msra.mxu0 0
    %1141 = vmatprep.subr.bf16.mxu0 0
    %1142 = vmatpush2.bf16.msra.mxu0 0
    %1143 = vmatprep.subr.bf16.mxu0 0
    %1144 = vmatpush2.bf16.msra.mxu0 0
    %1145 = vmatprep.subr.bf16.mxu0 0
    %1146 = vmatpush2.bf16.msra.mxu0 0
    %1147 = vmatprep.subr.bf16.mxu0 0
    %1148 = vmatpush2.bf16.msra.mxu0 0
    %1149 = vmatprep.mubr.bf16.mxu0 0
    %1150 = vmatmul.mubr.bf16.gmra.mxu0 %v1115
    %v1151 = vpop.f32.mrf.mxu0
    %v1152 = vadd.f32 0.0, %v1151
    %v1153 = vpop.f32.mrf.mxu0
    %v1154 = vpop.f32.mrf.mxu0
    %v1155 = vpop.f32.mrf.mxu0
    %1156 = vdwg.mxu0
    %v1158 = vrot.slane %v1152, 1
    %v1159 = vrot.slane %v1152, 2
    %v1162 = vadd.f32 %v194, %v1158
    %v1163 = vadd.f32 %v197, %v1159
    %v1164 = vxor.u32 %v1162, 2147483648
    %v1165 = vxor.u32 %v1163, 2147483648
    %v1166 = vmul.f32 %v1164, 1.442695
    %v1167 = vpow.pop %v1166
    %v1168 = vmul.f32 %v1165, 1.442695
    %v1169 = vpow.pop %v1168
    %v1170 = vadd.f32 %v1167, 1.0
    %v1171 = vadd.f32 %v1169, 1.0
    %v1172 = vrcp.pop %v1170
    %v1173 = vmul.f32 1.0, %v1172
    %v1174 = vrcp.pop %v1171
    %v1175 = vmul.f32 1.0, %v1174
    %v1176 = vtanh.pop %v1162
    %v1177 = vtanh.pop %v1163
    %v1180 = vrot.slane %v1077, 7
    %v1181 = vrot.slane %v1078, 7
    %v1184 = vmul.f32 %v1173, %v1180
    %v1185 = vmul.f32 %v1175, %v1181
    %1188 = vrot.lane.b32.xlu0 %v1176, 64
    %v1189 = vpop.permute.xlu0 %1188
    %1190 = vrot.lane.b32.xlu0 %v1177, 64
    %v1191 = vpop.permute.xlu0 %1190
    %v1194 = vmul.f32 %v1173, %v1189
    %v1195 = vmul.f32 %v1175, %v1191
    %1198 = vrot.lane.b32.xlu0 %v1194, 32
    %v1199 = vpop.permute.xlu0 %1198
    %1200 = vrot.lane.b32.xlu0 %v1195, 32
    %v1201 = vpop.permute.xlu0 %1200
    %v1204 = vadd.f32 %v1184, %v1199
    %v1205 = vadd.f32 %v1185, %v1201
    %v1206 = vtanh.pop %v1204
    %v1207 = vtanh.pop %v1205
    %1210 = vrot.lane.b32.xlu0 %v1206, 64
    %v1211 = vpop.permute.xlu0 %1210
    %1212 = vrot.lane.b32.xlu0 %v1207, 64
    %v1213 = vpop.permute.xlu0 %1212
    %v1216 = vmul.f32 %v1173, %v1211
    %v1217 = vmul.f32 %v1175, %v1213
    %1220 = vrot.lane.b32.xlu0 %v1216, 32
    %v1221 = vpop.permute.xlu0 %1220
    %1222 = vrot.lane.b32.xlu0 %v1217, 32
    %v1223 = vpop.permute.xlu0 %1222
    %vm1226 = vcmask 261127
    %1227 = vst.msk [vmem:[#allocation2] sm:$0x80] %vm1226, %v1221
    %1228 = vst.msk [vmem:[#allocation2 + $0x8] sm:$0x80] %vm1226, %v1223
    %v1229 = vld [vmem:[#allocation2] sm:$0xff]
    %v1230 = vld [vmem:[#allocation2 + $0x8] sm:$0xff]
    %v1231 = vpack.c.bf16 %v1230, %v1229
    %v1232 = vld [vmem:[%s8] sm:$0xf]
    %v1233 = vld [vmem:[%s8 + $0x4] sm:$0xf]
    %v1234 = vld [vmem:[%s8 + $0x8] sm:$0xf]
    %v1235 = vld [vmem:[%s8 + $0xc] sm:$0xf]
    %v1236 = vld [vmem:[%s9] sm:$0x1]
    %v1238 = vlaneseq
    %v1239 = vshrl.u32 %v1238, 7
    %v1240 = vsub.s32 0, %v1239
    %v1241 = vrot.slane %v1236, %v1240
    %v1247 = vunpack.c.l.b16 %v1232
    %v1248 = vunpack.c.l.b16 %v1233
    %v1249 = vunpack.c.l.b16 %v1234
    %v1250 = vunpack.c.l.b16 %v1235
    %v1251 = vpack.c.b16 %v1248, %v1247
    %v1252 = vpack.c.b16 %v1250, %v1249
    %v1256 = vsel %vm230, %v1231, 0
    %1258 = vmatprep.subr.bf16.mxu0 0
    %1259 = vmatpush1.bf16.msra.mxu0 0
    %1260 = vmatprep.subr.bf16.mxu0 0
    %1261 = vmatpush1.bf16.msra.mxu0 0
    %1262 = vmatprep.subr.bf16.mxu0 0
    %1263 = vmatpush1.bf16.msra.mxu0 0
    %1264 = vmatprep.subr.bf16.mxu0 0
    %1265 = vmatpush1.bf16.msra.mxu0 0
    %1266 = vmatprep.subr.bf16.mxu0 0
    %1267 = vmatpush1.bf16.msra.mxu0 0
    %1268 = vmatprep.subr.bf16.mxu0 0
    %1269 = vmatpush1.bf16.msra.mxu0 0
    %1270 = vmatprep.subr.bf16.mxu0 0
    %1271 = vmatpush1.bf16.msra.mxu0 %v1252
    %1272 = vmatprep.subr.bf16.mxu0 0
    %1273 = vmatpush1.bf16.msra.mxu0 %v1251
    %1274 = vmatprep.subr.bf16.mxu0 0
    %1275 = vmatpush2.bf16.msra.mxu0 0
    %1276 = vmatprep.subr.bf16.mxu0 0
    %1277 = vmatpush2.bf16.msra.mxu0 0
    %1278 = vmatprep.subr.bf16.mxu0 0
    %1279 = vmatpush2.bf16.msra.mxu0 0
    %1280 = vmatprep.subr.bf16.mxu0 0
    %1281 = vmatpush2.bf16.msra.mxu0 0
    %1282 = vmatprep.subr.bf16.mxu0 0
    %1283 = vmatpush2.bf16.msra.mxu0 0
    %1284 = vmatprep.subr.bf16.mxu0 0
    %1285 = vmatpush2.bf16.msra.mxu0 0
    %1286 = vmatprep.subr.bf16.mxu0 0
    %1287 = vmatpush2.bf16.msra.mxu0 0
    %1288 = vmatprep.subr.bf16.mxu0 0
    %1289 = vmatpush2.bf16.msra.mxu0 0
    %1290 = vmatprep.mubr.bf16.mxu0 0
    %1291 = vmatmul.mubr.bf16.gmra.mxu0 %v1256
    %v1292 = vpop.f32.mrf.mxu0
    %v1293 = vadd.f32 %v1241, %v1292
    %v1294 = vpop.f32.mrf.mxu0
    %v1295 = vpop.f32.mrf.mxu0
    %v1296 = vadd.f32 %v1241, %v1295
    %v1297 = vpop.f32.mrf.mxu0
    %1298 = vdwg.mxu0
    %v1299 = vld [vmem:[#allocation11] sm:$0xf]
    %v1300 = vld [vmem:[#allocation11 + $0x4] sm:$0xf]
    %v1301 = vld [vmem:[#allocation11 + $0x8] sm:$0xf]
    %v1302 = vld [vmem:[#allocation11 + $0xc] sm:$0xf]
    %v1303 = vld [vmem:[#allocation12] sm:$0x1]
    %v1304 = vld [vmem:[%s10] sm:$0x1]
    %v1305 = vpack.c.bf16 %v1216, %v1216
    %v1306 = vpack.c.bf16 %v1217, %v1217
    %v1308 = vlaneseq
    %v1309 = vshrl.u32 %v1308, 7
    %v1310 = vsub.s32 0, %v1309
    %v1311 = vrot.slane %v1303, %v1310
    %v1315 = vunpack.c.l.b16 %v1305
    %v1316 = vunpack.c.l.b16 %v1306
    %v1317 = vrot.slane %v1315, 7
    %v1318 = vrot.slane %v1316, 6
    %v1319 = vsel %vm349, %v1318, %v1317
    %v1320 = vpack.c.b16 %v1319, %v1319
    %1321 = vrot.lane.b32.xlu0 %v1320, 32
    %v1322 = vpop.permute.xlu0 %1321
    %v1327 = vunpack.c.l.b16 %v1299
    %v1328 = vunpack.c.l.b16 %v1300
    %v1329 = vunpack.c.l.b16 %v1301
    %v1330 = vunpack.c.l.b16 %v1302
    %v1331 = vpack.c.b16 %v1328, %v1327
    %v1332 = vpack.c.b16 %v1330, %v1329
    %v1336 = vsel %vm230, %v1322, 0
    %1338 = vmatprep.subr.bf16.mxu0 0
    %1339 = vmatpush1.bf16.msra.mxu0 0
    %1340 = vmatprep.subr.bf16.mxu0 0
    %1341 = vmatpush1.bf16.msra.mxu0 0
    %1342 = vmatprep.subr.bf16.mxu0 0
    %1343 = vmatpush1.bf16.msra.mxu0 0
    %1344 = vmatprep.subr.bf16.mxu0 0
    %1345 = vmatpush1.bf16.msra.mxu0 0
    %1346 = vmatprep.subr.bf16.mxu0 0
    %1347 = vmatpush1.bf16.msra.mxu0 0
    %1348 = vmatprep.subr.bf16.mxu0 0
    %1349 = vmatpush1.bf16.msra.mxu0 0
    %1350 = vmatprep.subr.bf16.mxu0 0
    %1351 = vmatpush1.bf16.msra.mxu0 %v1332
    %1352 = vmatprep.subr.bf16.mxu0 0
    %1353 = vmatpush1.bf16.msra.mxu0 %v1331
    %1354 = vmatprep.subr.bf16.mxu0 0
    %1355 = vmatpush2.bf16.msra.mxu0 0
    %1356 = vmatprep.subr.bf16.mxu0 0
    %1357 = vmatpush2.bf16.msra.mxu0 0
    %1358 = vmatprep.subr.bf16.mxu0 0
    %1359 = vmatpush2.bf16.msra.mxu0 0
    %1360 = vmatprep.subr.bf16.mxu0 0
    %1361 = vmatpush2.bf16.msra.mxu0 0
    %1362 = vmatprep.subr.bf16.mxu0 0
    %1363 = vmatpush2.bf16.msra.mxu0 0
    %1364 = vmatprep.subr.bf16.mxu0 0
    %1365 = vmatpush2.bf16.msra.mxu0 0
    %1366 = vmatprep.subr.bf16.mxu0 0
    %1367 = vmatpush2.bf16.msra.mxu0 0
    %1368 = vmatprep.subr.bf16.mxu0 0
    %1369 = vmatpush2.bf16.msra.mxu0 0
    %1370 = vmatprep.mubr.bf16.mxu0 0
    %1371 = vmatmul.mubr.bf16.gmra.mxu0 %v1336
    %v1372 = vpop.f32.mrf.mxu0
    %v1373 = vadd.f32 %v1311, %v1372
    %v1374 = vpop.f32.mrf.mxu0
    %v1375 = vpop.f32.mrf.mxu0
    %v1376 = vpop.f32.mrf.mxu0
    %1377 = vdwg.mxu0
    %v1380 = vunpack.c.l.s4 1966171168
    %v1381 = vunpack.c.0.s8 %v1380
    %v1382 = vlaneseq
    %v1383 = vshrl.u32 %v1382, 7
    %v1384 = vsub.s32 %v1381, %v1383
    %v1385 = vrot.slane %v1373, %v1384
    %v1386 = vcombine.high %v1385, %v1385
    %v1388 = vunpack.c.l.s4 1966171168
    %v1389 = vunpack.c.0.s8 %v1388
    %v1390 = vlaneseq
    %v1391 = vshrl.u32 %v1390, 7
    %v1392 = vsub.s32 %v1389, %v1391
    %v1393 = vrot.slane %v1385, %v1392
    %v1395 = vunpack.c.l.s4 1966171168
    %v1396 = vunpack.c.0.s8 %v1395
    %v1397 = vlaneseq
    %v1398 = vshrl.u32 %v1397, 7
    %v1399 = vsub.s32 %v1396, %v1398
    %v1400 = vrot.slane %v1386, %v1399
    %v1401 = vlaneseq
    %v1402 = vshrl.u32 %v1401, 7
    %v1403 = vsub.s32 0, %v1402
    %v1404 = vrot.slane %v1393, %v1403
    %v1405 = vlaneseq
    %v1406 = vshrl.u32 %v1405, 7
    %v1407 = vsub.s32 0, %v1406
    %v1408 = vrot.slane %v1400, %v1407
    %v1411 = vadd.f32 %v1404, %v1293
    %v1412 = vadd.f32 %v1408, %v1296
    %v1413 = vtanh.pop %v1411
    %v1414 = vtanh.pop %v1412
    %v1416 = vlaneseq
    %v1417 = vshrl.u32 %v1416, 7
    %v1418 = vsub.s32 0, %v1417
    %v1419 = vrot.slane %v1304, %v1418
    %v1421 = vmul.f32 %v1419, %v1413
    %v1422 = vmul.f32 %v1419, %v1414
    %v1423 = vsel %vm230, %v1421, 0.0
    %1424 = vadd.xlane.f32.xlu0 %v1423
    %v1425 = vpop.xlane.xlu0 %1424
    %v1426 = vsel %vm230, %v1422, 0.0
    %1427 = vadd.xlane.f32.xlu0 %v1426
    %v1428 = vpop.xlane.xlu0 %1427
    %v1429 = vtanh.pop %v1425
    %v1430 = vtanh.pop %v1428
    %v1431 = vmul.f32 %v1429, 10.0
    %v1432 = vmul.f32 %v1430, 10.0
    %v1435 = vlaneseq
    %v1436 = vand.u32 %v1435, 127
    %v1437 = vlaneseq
    %v1438 = vshrl.u32 %v1437, 7
    %v1439 = vsub.s32 %v1436, %v1438
    %v1440 = vrot.slane %v1431, %v1439
    %v1441 = vlaneseq
    %v1442 = vshrl.u32 %v1441, 7
    %v1443 = vsub.s32 %v1436, %v1442
    %v1444 = vrot.slane %v1432, %v1443
    %v1445 = vsel %vm349, %v1444, %v1440
    %vm1447 = vcmask 58368
    %v1448 = vsel %vm1447, %v1445, -inf
    %1449 = vmax.xlane.f32.xlu0 %v1448
    %v1450 = vpop.xlane.xlu0 %1449
    %v1452 = vlaneseq
    %v1453 = vshrl.u32 %v1452, 7
    %v1454 = vsub.s32 0, %v1453
    %v1455 = vrot.slane %v1450, %v1454
    %v1456 = vlaneseq
    %v1457 = vshrl.u32 %v1456, 7
    %v1458 = vsub.s32 1, %v1457
    %v1459 = vrot.slane %v1450, %v1458
    %v1462 = vsub.f32 %v1431, %v1455
    %v1463 = vsub.f32 %v1432, %v1459
    %v1464 = vmul.f32 %v1462, 1.442695
    %v1465 = vpow.pop %v1464
    %v1466 = vmul.f32 %v1463, 1.442695
    %v1467 = vpow.pop %v1466
    %1470 = vset.pattern.permute.xlu0 0
    %1471 = vperm.xlu0 %1470, %v1465
    %v1472 = vpop.permute.xlu0 %1471
    %1473 = vset.pattern.permute.xlu0 0
    %1474 = vperm.xlu0 %1473, %v1467
    %v1475 = vpop.permute.xlu0 %1474
    %v1476 = vlaneseq
    %v1477 = vshrl.u32 %v1476, 7
    %v1478 = vsub.s32 %v1436, %v1477
    %v1479 = vrot.slane %v1472, %v1478
    %v1480 = vlaneseq
    %v1481 = vshrl.u32 %v1480, 7
    %v1482 = vsub.s32 %v1436, %v1481
    %v1483 = vrot.slane %v1475, %v1482
    %v1484 = vsel %vm349, %v1483, %v1479
    %v1486 = vsel %vm1447, %v1484, 0.0
    %1487 = vadd.xlane.f32.xlu0 %v1486
    %v1488 = vpop.xlane.xlu0 %1487
    %v1489 = vrcp.pop %v1488
    %v1491 = vlaneseq
    %v1492 = vshrl.u32 %v1491, 7
    %v1493 = vsub.s32 0, %v1492
    %v1494 = vrot.slane %v1489, %v1493
    %v1495 = vlaneseq
    %v1496 = vshrl.u32 %v1495, 7
    %v1497 = vsub.s32 1, %v1496
    %v1498 = vrot.slane %v1489, %v1497
    %v1501 = vmul.f32 %v1465, %v1494
    %v1502 = vmul.f32 %v1467, %v1498
    %1504 = vset.pattern.permute.xlu0 0
    %1505 = vperm.xlu0 %1504, %v1501
    %v1506 = vpop.permute.xlu0 %1505
    %v1507 = vlaneseq
    %v1508 = vshrl.u32 %v1507, 7
    %v1509 = vsub.s32 %v1436, %v1508
    %v1510 = vrot.slane %v1506, %v1509
    %v1511 = vsel %vm151, %v1510, 0
    %1513 = vmatprep.subr.mxu0 0.0
    %1514 = vmatpush1.msra.mxu0 0.0
    %1515 = vmatprep.subr.mxu0 0.0
    %1516 = vmatpush1.msra.mxu0 0.0
    %1517 = vmatprep.subr.mxu0 0.0
    %1518 = vmatpush1.msra.mxu0 0.0
    %1519 = vmatprep.subr.mxu0 0.0
    %1520 = vmatpush1.msra.mxu0 0.0
    %1521 = vmatprep.subr.mxu0 0.0
    %1522 = vmatpush1.msra.mxu0 0.0
    %1523 = vmatprep.subr.mxu0 0.0
    %1524 = vmatpush1.msra.mxu0 0.0
    %1525 = vmatprep.subr.mxu0 0.0
    %1526 = vmatpush1.msra.mxu0 0.0
    %1527 = vmatprep.subr.mxu0 0.0
    %1528 = vmatpush1.msra.mxu0 0.0
    %1529 = vmatprep.subr.mxu0 0.0
    %1530 = vmatpush1.msra.mxu0 0.0
    %1531 = vmatprep.subr.mxu0 0.0
    %1532 = vmatpush1.msra.mxu0 0.0
    %1533 = vmatprep.subr.mxu0 0.0
    %1534 = vmatpush1.msra.mxu0 0.0
    %1535 = vmatprep.subr.mxu0 0.0
    %1536 = vmatpush1.msra.mxu0 0.0
    %1537 = vmatprep.subr.mxu0 0.0
    %1538 = vmatpush1.msra.mxu0 0.0
    %1539 = vmatprep.subr.mxu0 0.0
    %1540 = vmatpush1.msra.mxu0 0.0
    %1541 = vmatprep.subr.mxu0 0.0
    %1542 = vmatpush1.msra.mxu0 0.0
    %1543 = vmatprep.subr.mxu0 0.0
    %1544 = vmatpush1.msra.mxu0 %v1293
    %1545 = vmatprep.subr.mxu0 0.0
    %1546 = vmatpush2.msra.mxu0 0.0
    %1547 = vmatprep.subr.mxu0 0.0
    %1548 = vmatpush2.msra.mxu0 0.0
    %1549 = vmatprep.subr.mxu0 0.0
    %1550 = vmatpush2.msra.mxu0 0.0
    %1551 = vmatprep.subr.mxu0 0.0
    %1552 = vmatpush2.msra.mxu0 0.0
    %1553 = vmatprep.subr.mxu0 0.0
    %1554 = vmatpush2.msra.mxu0 0.0
    %1555 = vmatprep.subr.mxu0 0.0
    %1556 = vmatpush2.msra.mxu0 0.0
    %1557 = vmatprep.subr.mxu0 0.0
    %1558 = vmatpush2.msra.mxu0 0.0
    %1559 = vmatprep.subr.mxu0 0.0
    %1560 = vmatpush2.msra.mxu0 0.0
    %1561 = vmatprep.subr.mxu0 0.0
    %1562 = vmatpush2.msra.mxu0 0.0
    %1563 = vmatprep.subr.mxu0 0.0
    %1564 = vmatpush2.msra.mxu0 0.0
    %1565 = vmatprep.subr.mxu0 0.0
    %1566 = vmatpush2.msra.mxu0 0.0
    %1567 = vmatprep.subr.mxu0 0.0
    %1568 = vmatpush2.msra.mxu0 0.0
    %1569 = vmatprep.subr.mxu0 0.0
    %1570 = vmatpush2.msra.mxu0 0.0
    %1571 = vmatprep.subr.mxu0 0.0
    %1572 = vmatpush2.msra.mxu0 0.0
    %1573 = vmatprep.subr.mxu0 0.0
    %1574 = vmatpush2.msra.mxu0 0.0
    %1575 = vmatprep.subr.mxu0 0.0
    %1576 = vmatpush2.msra.mxu0 0.0
    %1577 = vmatprep.mubr.f32.mxu0 0.0
    %1578 = vmatmul.mubr.f32.gmra.mxu0 %v1511
    %v1579 = vpop.f32.mrf.mxu0
    %v1580 = vadd.f32 0.0, %v1579
    %v1581 = vpop.f32.mrf.mxu0
    %1582 = vdwg.mxu0
    %1584 = vset.pattern.permute.xlu0 0
    %1585 = vperm.xlu0 %1584, %v1502
    %v1586 = vpop.permute.xlu0 %1585
    %v1587 = vlaneseq
    %v1588 = vshrl.u32 %v1587, 7
    %v1589 = vsub.s32 %v1436, %v1588
    %v1590 = vrot.slane %v1586, %v1589
    %v1591 = vsel %vm151, %v1590, 0
    %1593 = vmatprep.subr.mxu0 0.0
    %1594 = vmatpush1.msra.mxu0 0.0
    %1595 = vmatprep.subr.mxu0 0.0
    %1596 = vmatpush1.msra.mxu0 0.0
    %1597 = vmatprep.subr.mxu0 0.0
    %1598 = vmatpush1.msra.mxu0 0.0
    %1599 = vmatprep.subr.mxu0 0.0
    %1600 = vmatpush1.msra.mxu0 0.0
    %1601 = vmatprep.subr.mxu0 0.0
    %1602 = vmatpush1.msra.mxu0 0.0
    %1603 = vmatprep.subr.mxu0 0.0
    %1604 = vmatpush1.msra.mxu0 0.0
    %1605 = vmatprep.subr.mxu0 0.0
    %1606 = vmatpush1.msra.mxu0 0.0
    %1607 = vmatprep.subr.mxu0 0.0
    %1608 = vmatpush1.msra.mxu0 0.0
    %1609 = vmatprep.subr.mxu0 0.0
    %1610 = vmatpush1.msra.mxu0 0.0
    %1611 = vmatprep.subr.mxu0 0.0
    %1612 = vmatpush1.msra.mxu0 0.0
    %1613 = vmatprep.subr.mxu0 0.0
    %1614 = vmatpush1.msra.mxu0 0.0
    %1615 = vmatprep.subr.mxu0 0.0
    %1616 = vmatpush1.msra.mxu0 0.0
    %1617 = vmatprep.subr.mxu0 0.0
    %1618 = vmatpush1.msra.mxu0 0.0
    %1619 = vmatprep.subr.mxu0 0.0
    %1620 = vmatpush1.msra.mxu0 0.0
    %1621 = vmatprep.subr.mxu0 0.0
    %1622 = vmatpush1.msra.mxu0 0.0
    %1623 = vmatprep.subr.mxu0 0.0
    %1624 = vmatpush1.msra.mxu0 %v1296
    %1625 = vmatprep.subr.mxu0 0.0
    %1626 = vmatpush2.msra.mxu0 0.0
    %1627 = vmatprep.subr.mxu0 0.0
    %1628 = vmatpush2.msra.mxu0 0.0
    %1629 = vmatprep.subr.mxu0 0.0
    %1630 = vmatpush2.msra.mxu0 0.0
    %1631 = vmatprep.subr.mxu0 0.0
    %1632 = vmatpush2.msra.mxu0 0.0
    %1633 = vmatprep.subr.mxu0 0.0
    %1634 = vmatpush2.msra.mxu0 0.0
    %1635 = vmatprep.subr.mxu0 0.0
    %1636 = vmatpush2.msra.mxu0 0.0
    %1637 = vmatprep.subr.mxu0 0.0
    %1638 = vmatpush2.msra.mxu0 0.0
    %1639 = vmatprep.subr.mxu0 0.0
    %1640 = vmatpush2.msra.mxu0 0.0
    %1641 = vmatprep.subr.mxu0 0.0
    %1642 = vmatpush2.msra.mxu0 0.0
    %1643 = vmatprep.subr.mxu0 0.0
    %1644 = vmatpush2.msra.mxu0 0.0
    %1645 = vmatprep.subr.mxu0 0.0
    %1646 = vmatpush2.msra.mxu0 0.0
    %1647 = vmatprep.subr.mxu0 0.0
    %1648 = vmatpush2.msra.mxu0 0.0
    %1649 = vmatprep.subr.mxu0 0.0
    %1650 = vmatpush2.msra.mxu0 0.0
    %1651 = vmatprep.subr.mxu0 0.0
    %1652 = vmatpush2.msra.mxu0 0.0
    %1653 = vmatprep.subr.mxu0 0.0
    %1654 = vmatpush2.msra.mxu0 0.0
    %1655 = vmatprep.subr.mxu0 0.0
    %1656 = vmatpush2.msra.mxu0 0.0
    %1657 = vmatprep.mubr.f32.mxu0 0.0
    %1658 = vmatmul.mubr.f32.gmra.mxu0 %v1591
    %v1659 = vpop.f32.mrf.mxu0
    %v1660 = vadd.f32 0.0, %v1659
    %v1661 = vpop.f32.mrf.mxu0
    %1662 = vdwg.mxu0
    %v1663 = vpack.c.bf16 %v1580, %v1580
    %v1664 = vpack.c.bf16 %v1660, %v1660
    %v1667 = vunpack.c.l.b16 %v1663
    %v1668 = vunpack.c.l.b16 %v1664
    %v1669 = vrot.slane %v1668, 7
    %v1670 = vsel %vm349, %v1669, %v1667
    %v1671 = vpack.c.b16 %v1670, %v1670
    %v1673 = vsel %vm230, %v1671, 0
    %1675 = vmatprep.subr.bf16.mxu0 0
    %1676 = vmatpush1.bf16.msra.mxu0 0
    %1677 = vmatprep.subr.bf16.mxu0 0
    %1678 = vmatpush1.bf16.msra.mxu0 0
    %1679 = vmatprep.subr.bf16.mxu0 0
    %1680 = vmatpush1.bf16.msra.mxu0 0
    %1681 = vmatprep.subr.bf16.mxu0 0
    %1682 = vmatpush1.bf16.msra.mxu0 0
    %1683 = vmatprep.subr.bf16.mxu0 0
    %1684 = vmatpush1.bf16.msra.mxu0 0
    %1685 = vmatprep.subr.bf16.mxu0 0
    %1686 = vmatpush1.bf16.msra.mxu0 0
    %1687 = vmatprep.subr.bf16.mxu0 0
    %1688 = vmatpush1.bf16.msra.mxu0 %v1332
    %1689 = vmatprep.subr.bf16.mxu0 0
    %1690 = vmatpush1.bf16.msra.mxu0 %v1331
    %1691 = vmatprep.subr.bf16.mxu0 0
    %1692 = vmatpush2.bf16.msra.mxu0 0
    %1693 = vmatprep.subr.bf16.mxu0 0
    %1694 = vmatpush2.bf16.msra.mxu0 0
    %1695 = vmatprep.subr.bf16.mxu0 0
    %1696 = vmatpush2.bf16.msra.mxu0 0
    %1697 = vmatprep.subr.bf16.mxu0 0
    %1698 = vmatpush2.bf16.msra.mxu0 0
    %1699 = vmatprep.subr.bf16.mxu0 0
    %1700 = vmatpush2.bf16.msra.mxu0 0
    %1701 = vmatprep.subr.bf16.mxu0 0
    %1702 = vmatpush2.bf16.msra.mxu0 0
    %1703 = vmatprep.subr.bf16.mxu0 0
    %1704 = vmatpush2.bf16.msra.mxu0 0
    %1705 = vmatprep.subr.bf16.mxu0 0
    %1706 = vmatpush2.bf16.msra.mxu0 0
    %1707 = vmatprep.mubr.bf16.mxu0 0
    %1708 = vmatmul.mubr.bf16.gmra.mxu0 %v1673
    %v1709 = vpop.f32.mrf.mxu0
    %v1710 = vadd.f32 %v1311, %v1709
    %v1711 = vpop.f32.mrf.mxu0
    %v1712 = vpop.f32.mrf.mxu0
    %v1713 = vpop.f32.mrf.mxu0
    %1714 = vdwg.mxu0
    %v1717 = vunpack.c.l.s4 1966171168
    %v1718 = vunpack.c.0.s8 %v1717
    %v1719 = vlaneseq
    %v1720 = vshrl.u32 %v1719, 7
    %v1721 = vsub.s32 %v1718, %v1720
    %v1722 = vrot.slane %v1710, %v1721
    %v1723 = vcombine.high %v1722, %v1722
    %v1725 = vunpack.c.l.s4 1966171168
    %v1726 = vunpack.c.0.s8 %v1725
    %v1727 = vlaneseq
    %v1728 = vshrl.u32 %v1727, 7
    %v1729 = vsub.s32 %v1726, %v1728
    %v1730 = vrot.slane %v1722, %v1729
    %v1732 = vunpack.c.l.s4 1966171168
    %v1733 = vunpack.c.0.s8 %v1732
    %v1734 = vlaneseq
    %v1735 = vshrl.u32 %v1734, 7
    %v1736 = vsub.s32 %v1733, %v1735
    %v1737 = vrot.slane %v1723, %v1736
    %v1738 = vlaneseq
    %v1739 = vshrl.u32 %v1738, 7
    %v1740 = vsub.s32 0, %v1739
    %v1741 = vrot.slane %v1730, %v1740
    %v1742 = vlaneseq
    %v1743 = vshrl.u32 %v1742, 7
    %v1744 = vsub.s32 0, %v1743
    %v1745 = vrot.slane %v1737, %v1744
    %v1748 = vadd.f32 %v1741, %v1293
    %v1749 = vadd.f32 %v1745, %v1296
    %v1750 = vtanh.pop %v1748
    %v1751 = vtanh.pop %v1749
    %v1752 = vmul.f32 %v1419, %v1750
    %v1753 = vmul.f32 %v1419, %v1751
    %v1754 = vsel %vm230, %v1752, 0.0
    %1755 = vadd.xlane.f32.xlu0 %v1754
    %v1756 = vpop.xlane.xlu0 %1755
    %v1757 = vsel %vm230, %v1753, 0.0
    %1758 = vadd.xlane.f32.xlu0 %v1757
    %v1759 = vpop.xlane.xlu0 %1758
    %v1760 = vtanh.pop %v1756
    %v1761 = vtanh.pop %v1759
    %v1762 = vmul.f32 %v1760, 10.0
    %v1763 = vmul.f32 %v1761, 10.0
    %v1766 = vlaneseq
    %v1767 = vshrl.u32 %v1766, 7
    %v1768 = vsub.s32 %v1436, %v1767
    %v1769 = vrot.slane %v1762, %v1768
    %v1770 = vlaneseq
    %v1771 = vshrl.u32 %v1770, 7
    %v1772 = vsub.s32 %v1436, %v1771
    %v1773 = vrot.slane %v1763, %v1772
    %v1774 = vsel %vm349, %v1773, %v1769
    %v1776 = vsel %vm1447, %v1774, -inf
    %1777 = vmax.xlane.f32.xlu0 %v1776
    %v1778 = vpop.xlane.xlu0 %1777
    %v1780 = vlaneseq
    %v1781 = vshrl.u32 %v1780, 7
    %v1782 = vsub.s32 0, %v1781
    %v1783 = vrot.slane %v1778, %v1782
    %v1784 = vlaneseq
    %v1785 = vshrl.u32 %v1784, 7
    %v1786 = vsub.s32 1, %v1785
    %v1787 = vrot.slane %v1778, %v1786
    %v1790 = vsub.f32 %v1762, %v1783
    %v1791 = vsub.f32 %v1763, %v1787
    %v1792 = vmul.f32 %v1790, 1.442695
    %v1793 = vpow.pop %v1792
    %v1794 = vmul.f32 %v1791, 1.442695
    %v1795 = vpow.pop %v1794
    %1798 = vset.pattern.permute.xlu0 0
    %1799 = vperm.xlu0 %1798, %v1793
    %v1800 = vpop.permute.xlu0 %1799
    %1801 = vset.pattern.permute.xlu0 0
    %1802 = vperm.xlu0 %1801, %v1795
    %v1803 = vpop.permute.xlu0 %1802
    %v1804 = vlaneseq
    %v1805 = vshrl.u32 %v1804, 7
    %v1806 = vsub.s32 %v1436, %v1805
    %v1807 = vrot.slane %v1800, %v1806
    %v1808 = vlaneseq
    %v1809 = vshrl.u32 %v1808, 7
    %v1810 = vsub.s32 %v1436, %v1809
    %v1811 = vrot.slane %v1803, %v1810
    %v1812 = vsel %vm349, %v1811, %v1807
    %v1814 = vsel %vm1447, %v1812, 0.0
    %1815 = vadd.xlane.f32.xlu0 %v1814
    %v1816 = vpop.xlane.xlu0 %1815
    %v1817 = vrcp.pop %v1816
    %v1819 = vlaneseq
    %v1820 = vshrl.u32 %v1819, 7
    %v1821 = vsub.s32 0, %v1820
    %v1822 = vrot.slane %v1817, %v1821
    %v1823 = vlaneseq
    %v1824 = vshrl.u32 %v1823, 7
    %v1825 = vsub.s32 1, %v1824
    %v1826 = vrot.slane %v1817, %v1825
    %v1829 = vmul.f32 %v1793, %v1822
    %v1830 = vmul.f32 %v1795, %v1826
    %1832 = vset.pattern.permute.xlu0 0
    %1833 = vperm.xlu0 %1832, %v1829
    %v1834 = vpop.permute.xlu0 %1833
    %v1835 = vlaneseq
    %v1836 = vshrl.u32 %v1835, 7
    %v1837 = vsub.s32 %v1436, %v1836
    %v1838 = vrot.slane %v1834, %v1837
    %v1839 = vsel %vm151, %v1838, 0
    %1841 = vmatprep.subr.mxu0 0.0
    %1842 = vmatpush1.msra.mxu0 0.0
    %1843 = vmatprep.subr.mxu0 0.0
    %1844 = vmatpush1.msra.mxu0 0.0
    %1845 = vmatprep.subr.mxu0 0.0
    %1846 = vmatpush1.msra.mxu0 0.0
    %1847 = vmatprep.subr.mxu0 0.0
    %1848 = vmatpush1.msra.mxu0 0.0
    %1849 = vmatprep.subr.mxu0 0.0
    %1850 = vmatpush1.msra.mxu0 0.0
    %1851 = vmatprep.subr.mxu0 0.0
    %1852 = vmatpush1.msra.mxu0 0.0
    %1853 = vmatprep.subr.mxu0 0.0
    %1854 = vmatpush1.msra.mxu0 0.0
    %1855 = vmatprep.subr.mxu0 0.0
    %1856 = vmatpush1.msra.mxu0 0.0
    %1857 = vmatprep.subr.mxu0 0.0
    %1858 = vmatpush1.msra.mxu0 0.0
    %1859 = vmatprep.subr.mxu0 0.0
    %1860 = vmatpush1.msra.mxu0 0.0
    %1861 = vmatprep.subr.mxu0 0.0
    %1862 = vmatpush1.msra.mxu0 0.0
    %1863 = vmatprep.subr.mxu0 0.0
    %1864 = vmatpush1.msra.mxu0 0.0
    %1865 = vmatprep.subr.mxu0 0.0
    %1866 = vmatpush1.msra.mxu0 0.0
    %1867 = vmatprep.subr.mxu0 0.0
    %1868 = vmatpush1.msra.mxu0 0.0
    %1869 = vmatprep.subr.mxu0 0.0
    %1870 = vmatpush1.msra.mxu0 0.0
    %1871 = vmatprep.subr.mxu0 0.0
    %1872 = vmatpush1.msra.mxu0 %v1293
    %1873 = vmatprep.subr.mxu0 0.0
    %1874 = vmatpush2.msra.mxu0 0.0
    %1875 = vmatprep.subr.mxu0 0.0
    %1876 = vmatpush2.msra.mxu0 0.0
    %1877 = vmatprep.subr.mxu0 0.0
    %1878 = vmatpush2.msra.mxu0 0.0
    %1879 = vmatprep.subr.mxu0 0.0
    %1880 = vmatpush2.msra.mxu0 0.0
    %1881 = vmatprep.subr.mxu0 0.0
    %1882 = vmatpush2.msra.mxu0 0.0
    %1883 = vmatprep.subr.mxu0 0.0
    %1884 = vmatpush2.msra.mxu0 0.0
    %1885 = vmatprep.subr.mxu0 0.0
    %1886 = vmatpush2.msra.mxu0 0.0
    %1887 = vmatprep.subr.mxu0 0.0
    %1888 = vmatpush2.msra.mxu0 0.0
    %1889 = vmatprep.subr.mxu0 0.0
    %1890 = vmatpush2.msra.mxu0 0.0
    %1891 = vmatprep.subr.mxu0 0.0
    %1892 = vmatpush2.msra.mxu0 0.0
    %1893 = vmatprep.subr.mxu0 0.0
    %1894 = vmatpush2.msra.mxu0 0.0
    %1895 = vmatprep.subr.mxu0 0.0
    %1896 = vmatpush2.msra.mxu0 0.0
    %1897 = vmatprep.subr.mxu0 0.0
    %1898 = vmatpush2.msra.mxu0 0.0
    %1899 = vmatprep.subr.mxu0 0.0
    %1900 = vmatpush2.msra.mxu0 0.0
    %1901 = vmatprep.subr.mxu0 0.0
    %1902 = vmatpush2.msra.mxu0 0.0
    %1903 = vmatprep.subr.mxu0 0.0
    %1904 = vmatpush2.msra.mxu0 0.0
    %1905 = vmatprep.mubr.f32.mxu0 0.0
    %1906 = vmatmul.mubr.f32.gmra.mxu0 %v1839
    %v1907 = vpop.f32.mrf.mxu0
    %v1908 = vadd.f32 0.0, %v1907
    %v1909 = vpop.f32.mrf.mxu0
    %1910 = vdwg.mxu0
    %1912 = vset.pattern.permute.xlu0 0
    %1913 = vperm.xlu0 %1912, %v1830
    %v1914 = vpop.permute.xlu0 %1913
    %v1915 = vlaneseq
    %v1916 = vshrl.u32 %v1915, 7
    %v1917 = vsub.s32 %v1436, %v1916
    %v1918 = vrot.slane %v1914, %v1917
    %v1919 = vsel %vm151, %v1918, 0
    %1921 = vmatprep.subr.mxu0 0.0
    %1922 = vmatpush1.msra.mxu0 0.0
    %1923 = vmatprep.subr.mxu0 0.0
    %1924 = vmatpush1.msra.mxu0 0.0
    %1925 = vmatprep.subr.mxu0 0.0
    %1926 = vmatpush1.msra.mxu0 0.0
    %1927 = vmatprep.subr.mxu0 0.0
    %1928 = vmatpush1.msra.mxu0 0.0
    %1929 = vmatprep.subr.mxu0 0.0
    %1930 = vmatpush1.msra.mxu0 0.0
    %1931 = vmatprep.subr.mxu0 0.0
    %1932 = vmatpush1.msra.mxu0 0.0
    %1933 = vmatprep.subr.mxu0 0.0
    %1934 = vmatpush1.msra.mxu0 0.0
    %1935 = vmatprep.subr.mxu0 0.0
    %1936 = vmatpush1.msra.mxu0 0.0
    %1937 = vmatprep.subr.mxu0 0.0
    %1938 = vmatpush1.msra.mxu0 0.0
    %1939 = vmatprep.subr.mxu0 0.0
    %1940 = vmatpush1.msra.mxu0 0.0
    %1941 = vmatprep.subr.mxu0 0.0
    %1942 = vmatpush1.msra.mxu0 0.0
    %1943 = vmatprep.subr.mxu0 0.0
    %1944 = vmatpush1.msra.mxu0 0.0
    %1945 = vmatprep.subr.mxu0 0.0
    %1946 = vmatpush1.msra.mxu0 0.0
    %1947 = vmatprep.subr.mxu0 0.0
    %1948 = vmatpush1.msra.mxu0 0.0
    %1949 = vmatprep.subr.mxu0 0.0
    %1950 = vmatpush1.msra.mxu0 0.0
    %1951 = vmatprep.subr.mxu0 0.0
    %1952 = vmatpush1.msra.mxu0 %v1296
    %1953 = vmatprep.subr.mxu0 0.0
    %1954 = vmatpush2.msra.mxu0 0.0
    %1955 = vmatprep.subr.mxu0 0.0
    %1956 = vmatpush2.msra.mxu0 0.0
    %1957 = vmatprep.subr.mxu0 0.0
    %1958 = vmatpush2.msra.mxu0 0.0
    %1959 = vmatprep.subr.mxu0 0.0
    %1960 = vmatpush2.msra.mxu0 0.0
    %1961 = vmatprep.subr.mxu0 0.0
    %1962 = vmatpush2.msra.mxu0 0.0
    %1963 = vmatprep.subr.mxu0 0.0
    %1964 = vmatpush2.msra.mxu0 0.0
    %1965 = vmatprep.subr.mxu0 0.0
    %1966 = vmatpush2.msra.mxu0 0.0
    %1967 = vmatprep.subr.mxu0 0.0
    %1968 = vmatpush2.msra.mxu0 0.0
    %1969 = vmatprep.subr.mxu0 0.0
    %1970 = vmatpush2.msra.mxu0 0.0
    %1971 = vmatprep.subr.mxu0 0.0
    %1972 = vmatpush2.msra.mxu0 0.0
    %1973 = vmatprep.subr.mxu0 0.0
    %1974 = vmatpush2.msra.mxu0 0.0
    %1975 = vmatprep.subr.mxu0 0.0
    %1976 = vmatpush2.msra.mxu0 0.0
    %1977 = vmatprep.subr.mxu0 0.0
    %1978 = vmatpush2.msra.mxu0 0.0
    %1979 = vmatprep.subr.mxu0 0.0
    %1980 = vmatpush2.msra.mxu0 0.0
    %1981 = vmatprep.subr.mxu0 0.0
    %1982 = vmatpush2.msra.mxu0 0.0
    %1983 = vmatprep.subr.mxu0 0.0
    %1984 = vmatpush2.msra.mxu0 0.0
    %1985 = vmatprep.mubr.f32.mxu0 0.0
    %1986 = vmatmul.mubr.f32.gmra.mxu0 %v1919
    %v1987 = vpop.f32.mrf.mxu0
    %v1988 = vadd.f32 0.0, %v1987
    %v1989 = vpop.f32.mrf.mxu0
    %1990 = vdwg.mxu0
    %v1991 = vpack.c.bf16 %v1908, %v1908
    %v1992 = vpack.c.bf16 %v1988, %v1988
    %v1995 = vunpack.c.l.b16 %v1991
    %v1996 = vunpack.c.l.b16 %v1992
    %v1997 = vrot.slane %v1996, 7
    %v1998 = vsel %vm349, %v1997, %v1995
    %v1999 = vpack.c.b16 %v1998, %v1998
    %v2001 = vsel %vm230, %v1999, 0
    %2003 = vmatprep.subr.bf16.mxu0 0
    %2004 = vmatpush1.bf16.msra.mxu0 0
    %2005 = vmatprep.subr.bf16.mxu0 0
    %2006 = vmatpush1.bf16.msra.mxu0 0
    %2007 = vmatprep.subr.bf16.mxu0 0
    %2008 = vmatpush1.bf16.msra.mxu0 0
    %2009 = vmatprep.subr.bf16.mxu0 0
    %2010 = vmatpush1.bf16.msra.mxu0 0
    %2011 = vmatprep.subr.bf16.mxu0 0
    %2012 = vmatpush1.bf16.msra.mxu0 0
    %2013 = vmatprep.subr.bf16.mxu0 0
    %2014 = vmatpush1.bf16.msra.mxu0 0
    %2015 = vmatprep.subr.bf16.mxu0 0
    %2016 = vmatpush1.bf16.msra.mxu0 %v1332
    %2017 = vmatprep.subr.bf16.mxu0 0
    %2018 = vmatpush1.bf16.msra.mxu0 %v1331
    %2019 = vmatprep.subr.bf16.mxu0 0
    %2020 = vmatpush2.bf16.msra.mxu0 0
    %2021 = vmatprep.subr.bf16.mxu0 0
    %2022 = vmatpush2.bf16.msra.mxu0 0
    %2023 = vmatprep.subr.bf16.mxu0 0
    %2024 = vmatpush2.bf16.msra.mxu0 0
    %2025 = vmatprep.subr.bf16.mxu0 0
    %2026 = vmatpush2.bf16.msra.mxu0 0
    %2027 = vmatprep.subr.bf16.mxu0 0
    %2028 = vmatpush2.bf16.msra.mxu0 0
    %2029 = vmatprep.subr.bf16.mxu0 0
    %2030 = vmatpush2.bf16.msra.mxu0 0
    %2031 = vmatprep.subr.bf16.mxu0 0
    %2032 = vmatpush2.bf16.msra.mxu0 0
    %2033 = vmatprep.subr.bf16.mxu0 0
    %2034 = vmatpush2.bf16.msra.mxu0 0
    %2035 = vmatprep.mubr.bf16.mxu0 0
    %2036 = vmatmul.mubr.bf16.gmra.mxu0 %v2001
    %v2037 = vpop.f32.mrf.mxu0
    %v2038 = vadd.f32 %v1311, %v2037
    %v2039 = vpop.f32.mrf.mxu0
    %v2040 = vpop.f32.mrf.mxu0
    %v2041 = vpop.f32.mrf.mxu0
    %2042 = vdwg.mxu0
    %v2045 = vunpack.c.l.s4 1966171168
    %v2046 = vunpack.c.0.s8 %v2045
    %v2047 = vlaneseq
    %v2048 = vshrl.u32 %v2047, 7
    %v2049 = vsub.s32 %v2046, %v2048
    %v2050 = vrot.slane %v2038, %v2049
    %v2051 = vcombine.high %v2050, %v2050
    %v2053 = vunpack.c.l.s4 1966171168
    %v2054 = vunpack.c.0.s8 %v2053
    %v2055 = vlaneseq
    %v2056 = vshrl.u32 %v2055, 7
    %v2057 = vsub.s32 %v2054, %v2056
    %v2058 = vrot.slane %v2050, %v2057
    %v2060 = vunpack.c.l.s4 1966171168
    %v2061 = vunpack.c.0.s8 %v2060
    %v2062 = vlaneseq
    %v2063 = vshrl.u32 %v2062, 7
    %v2064 = vsub.s32 %v2061, %v2063
    %v2065 = vrot.slane %v2051, %v2064
    %v2066 = vlaneseq
    %v2067 = vshrl.u32 %v2066, 7
    %v2068 = vsub.s32 0, %v2067
    %v2069 = vrot.slane %v2058, %v2068
    %v2070 = vlaneseq
    %v2071 = vshrl.u32 %v2070, 7
    %v2072 = vsub.s32 0, %v2071
    %v2073 = vrot.slane %v2065, %v2072
    %v2076 = vadd.f32 %v2069, %v1293
    %v2077 = vadd.f32 %v2073, %v1296
    %v2078 = vtanh.pop %v2076
    %v2079 = vtanh.pop %v2077
    %v2080 = vmul.f32 %v1419, %v2078
    %v2081 = vmul.f32 %v1419, %v2079
    %v2082 = vsel %vm230, %v2080, 0.0
    %2083 = vadd.xlane.f32.xlu0 %v2082
    %v2084 = vpop.xlane.xlu0 %2083
    %v2085 = vsel %vm230, %v2081, 0.0
    %2086 = vadd.xlane.f32.xlu0 %v2085
    %v2087 = vpop.xlane.xlu0 %2086
    %v2088 = vtanh.pop %v2084
    %v2089 = vtanh.pop %v2087
    %v2090 = vmul.f32 %v2088, 10.0
    %v2091 = vmul.f32 %v2089, 10.0
    %v2094 = vlaneseq
    %v2095 = vshrl.u32 %v2094, 7
    %v2096 = vsub.s32 %v1436, %v2095
    %v2097 = vrot.slane %v2090, %v2096
    %v2098 = vlaneseq
    %v2099 = vshrl.u32 %v2098, 7
    %v2100 = vsub.s32 %v1436, %v2099
    %v2101 = vrot.slane %v2091, %v2100
    %v2102 = vsel %vm349, %v2101, %v2097
    %v2104 = vsel %vm1447, %v2102, -inf
    %2105 = vmax.xlane.f32.xlu0 %v2104
    %v2106 = vpop.xlane.xlu0 %2105
    %v2108 = vlaneseq
    %v2109 = vshrl.u32 %v2108, 7
    %v2110 = vsub.s32 0, %v2109
    %v2111 = vrot.slane %v2106, %v2110
    %v2112 = vlaneseq
    %v2113 = vshrl.u32 %v2112, 7
    %v2114 = vsub.s32 1, %v2113
    %v2115 = vrot.slane %v2106, %v2114
    %v2118 = vsub.f32 %v2090, %v2111
    %v2119 = vsub.f32 %v2091, %v2115
    %v2120 = vmul.f32 %v2118, 1.442695
    %v2121 = vpow.pop %v2120
    %v2122 = vmul.f32 %v2119, 1.442695
    %v2123 = vpow.pop %v2122
    %2126 = vset.pattern.permute.xlu0 0
    %2127 = vperm.xlu0 %2126, %v2121
    %v2128 = vpop.permute.xlu0 %2127
    %2129 = vset.pattern.permute.xlu0 0
    %2130 = vperm.xlu0 %2129, %v2123
    %v2131 = vpop.permute.xlu0 %2130
    %v2132 = vlaneseq
    %v2133 = vshrl.u32 %v2132, 7
    %v2134 = vsub.s32 %v1436, %v2133
    %v2135 = vrot.slane %v2128, %v2134
    %v2136 = vlaneseq
    %v2137 = vshrl.u32 %v2136, 7
    %v2138 = vsub.s32 %v1436, %v2137
    %v2139 = vrot.slane %v2131, %v2138
    %v2140 = vsel %vm349, %v2139, %v2135
    %v2142 = vsel %vm1447, %v2140, 0.0
    %2143 = vadd.xlane.f32.xlu0 %v2142
    %v2144 = vpop.xlane.xlu0 %2143
    %v2145 = vrcp.pop %v2144
    %v2147 = vlaneseq
    %v2148 = vshrl.u32 %v2147, 7
    %v2149 = vsub.s32 0, %v2148
    %v2150 = vrot.slane %v2145, %v2149
    %v2151 = vlaneseq
    %v2152 = vshrl.u32 %v2151, 7
    %v2153 = vsub.s32 1, %v2152
    %v2154 = vrot.slane %v2145, %v2153
    %v2157 = vmul.f32 %v2121, %v2150
    %v2158 = vmul.f32 %v2123, %v2154
    %2160 = vset.pattern.permute.xlu0 0
    %2161 = vperm.xlu0 %2160, %v2157
    %v2162 = vpop.permute.xlu0 %2161
    %v2163 = vlaneseq
    %v2164 = vshrl.u32 %v2163, 7
    %v2165 = vsub.s32 %v1436, %v2164
    %v2166 = vrot.slane %v2162, %v2165
    %v2167 = vsel %vm151, %v2166, 0
    %2169 = vmatprep.subr.mxu0 0.0
    %2170 = vmatpush1.msra.mxu0 0.0
    %2171 = vmatprep.subr.mxu0 0.0
    %2172 = vmatpush1.msra.mxu0 0.0
    %2173 = vmatprep.subr.mxu0 0.0
    %2174 = vmatpush1.msra.mxu0 0.0
    %2175 = vmatprep.subr.mxu0 0.0
    %2176 = vmatpush1.msra.mxu0 0.0
    %2177 = vmatprep.subr.mxu0 0.0
    %2178 = vmatpush1.msra.mxu0 0.0
    %2179 = vmatprep.subr.mxu0 0.0
    %2180 = vmatpush1.msra.mxu0 0.0
    %2181 = vmatprep.subr.mxu0 0.0
    %2182 = vmatpush1.msra.mxu0 0.0
    %2183 = vmatprep.subr.mxu0 0.0
    %2184 = vmatpush1.msra.mxu0 0.0
    %2185 = vmatprep.subr.mxu0 0.0
    %2186 = vmatpush1.msra.mxu0 0.0
    %2187 = vmatprep.subr.mxu0 0.0
    %2188 = vmatpush1.msra.mxu0 0.0
    %2189 = vmatprep.subr.mxu0 0.0
    %2190 = vmatpush1.msra.mxu0 0.0
    %2191 = vmatprep.subr.mxu0 0.0
    %2192 = vmatpush1.msra.mxu0 0.0
    %2193 = vmatprep.subr.mxu0 0.0
    %2194 = vmatpush1.msra.mxu0 0.0
    %2195 = vmatprep.subr.mxu0 0.0
    %2196 = vmatpush1.msra.mxu0 0.0
    %2197 = vmatprep.subr.mxu0 0.0
    %2198 = vmatpush1.msra.mxu0 0.0
    %2199 = vmatprep.subr.mxu0 0.0
    %2200 = vmatpush1.msra.mxu0 %v1293
    %2201 = vmatprep.subr.mxu0 0.0
    %2202 = vmatpush2.msra.mxu0 0.0
    %2203 = vmatprep.subr.mxu0 0.0
    %2204 = vmatpush2.msra.mxu0 0.0
    %2205 = vmatprep.subr.mxu0 0.0
    %2206 = vmatpush2.msra.mxu0 0.0
    %2207 = vmatprep.subr.mxu0 0.0
    %2208 = vmatpush2.msra.mxu0 0.0
    %2209 = vmatprep.subr.mxu0 0.0
    %2210 = vmatpush2.msra.mxu0 0.0
    %2211 = vmatprep.subr.mxu0 0.0
    %2212 = vmatpush2.msra.mxu0 0.0
    %2213 = vmatprep.subr.mxu0 0.0
    %2214 = vmatpush2.msra.mxu0 0.0
    %2215 = vmatprep.subr.mxu0 0.0
    %2216 = vmatpush2.msra.mxu0 0.0
    %2217 = vmatprep.subr.mxu0 0.0
    %2218 = vmatpush2.msra.mxu0 0.0
    %2219 = vmatprep.subr.mxu0 0.0
    %2220 = vmatpush2.msra.mxu0 0.0
    %2221 = vmatprep.subr.mxu0 0.0
    %2222 = vmatpush2.msra.mxu0 0.0
    %2223 = vmatprep.subr.mxu0 0.0
    %2224 = vmatpush2.msra.mxu0 0.0
    %2225 = vmatprep.subr.mxu0 0.0
    %2226 = vmatpush2.msra.mxu0 0.0
    %2227 = vmatprep.subr.mxu0 0.0
    %2228 = vmatpush2.msra.mxu0 0.0
    %2229 = vmatprep.subr.mxu0 0.0
    %2230 = vmatpush2.msra.mxu0 0.0
    %2231 = vmatprep.subr.mxu0 0.0
    %2232 = vmatpush2.msra.mxu0 0.0
    %2233 = vmatprep.mubr.f32.mxu0 0.0
    %2234 = vmatmul.mubr.f32.gmra.mxu0 %v2167
    %v2235 = vpop.f32.mrf.mxu0
    %v2236 = vadd.f32 0.0, %v2235
    %v2237 = vpop.f32.mrf.mxu0
    %2238 = vdwg.mxu0
    %2240 = vset.pattern.permute.xlu0 0
    %2241 = vperm.xlu0 %2240, %v2158
    %v2242 = vpop.permute.xlu0 %2241
    %v2243 = vlaneseq
    %v2244 = vshrl.u32 %v2243, 7
    %v2245 = vsub.s32 %v1436, %v2244
    %v2246 = vrot.slane %v2242, %v2245
    %v2247 = vsel %vm151, %v2246, 0
    %2249 = vmatprep.subr.mxu0 0.0
    %2250 = vmatpush1.msra.mxu0 0.0
    %2251 = vmatprep.subr.mxu0 0.0
    %2252 = vmatpush1.msra.mxu0 0.0
    %2253 = vmatprep.subr.mxu0 0.0
    %2254 = vmatpush1.msra.mxu0 0.0
    %2255 = vmatprep.subr.mxu0 0.0
    %2256 = vmatpush1.msra.mxu0 0.0
    %2257 = vmatprep.subr.mxu0 0.0
    %2258 = vmatpush1.msra.mxu0 0.0
    %2259 = vmatprep.subr.mxu0 0.0
    %2260 = vmatpush1.msra.mxu0 0.0
    %2261 = vmatprep.subr.mxu0 0.0
    %2262 = vmatpush1.msra.mxu0 0.0
    %2263 = vmatprep.subr.mxu0 0.0
    %2264 = vmatpush1.msra.mxu0 0.0
    %2265 = vmatprep.subr.mxu0 0.0
    %2266 = vmatpush1.msra.mxu0 0.0
    %2267 = vmatprep.subr.mxu0 0.0
    %2268 = vmatpush1.msra.mxu0 0.0
    %2269 = vmatprep.subr.mxu0 0.0
    %2270 = vmatpush1.msra.mxu0 0.0
    %2271 = vmatprep.subr.mxu0 0.0
    %2272 = vmatpush1.msra.mxu0 0.0
    %2273 = vmatprep.subr.mxu0 0.0
    %2274 = vmatpush1.msra.mxu0 0.0
    %2275 = vmatprep.subr.mxu0 0.0
    %2276 = vmatpush1.msra.mxu0 0.0
    %2277 = vmatprep.subr.mxu0 0.0
    %2278 = vmatpush1.msra.mxu0 0.0
    %2279 = vmatprep.subr.mxu0 0.0
    %2280 = vmatpush1.msra.mxu0 %v1296
    %2281 = vmatprep.subr.mxu0 0.0
    %2282 = vmatpush2.msra.mxu0 0.0
    %2283 = vmatprep.subr.mxu0 0.0
    %2284 = vmatpush2.msra.mxu0 0.0
    %2285 = vmatprep.subr.mxu0 0.0
    %2286 = vmatpush2.msra.mxu0 0.0
    %2287 = vmatprep.subr.mxu0 0.0
    %2288 = vmatpush2.msra.mxu0 0.0
    %2289 = vmatprep.subr.mxu0 0.0
    %2290 = vmatpush2.msra.mxu0 0.0
    %2291 = vmatprep.subr.mxu0 0.0
    %2292 = vmatpush2.msra.mxu0 0.0
    %2293 = vmatprep.subr.mxu0 0.0
    %2294 = vmatpush2.msra.mxu0 0.0
    %2295 = vmatprep.subr.mxu0 0.0
    %2296 = vmatpush2.msra.mxu0 0.0
    %2297 = vmatprep.subr.mxu0 0.0
    %2298 = vmatpush2.msra.mxu0 0.0
    %2299 = vmatprep.subr.mxu0 0.0
    %2300 = vmatpush2.msra.mxu0 0.0
    %2301 = vmatprep.subr.mxu0 0.0
    %2302 = vmatpush2.msra.mxu0 0.0
    %2303 = vmatprep.subr.mxu0 0.0
    %2304 = vmatpush2.msra.mxu0 0.0
    %2305 = vmatprep.subr.mxu0 0.0
    %2306 = vmatpush2.msra.mxu0 0.0
    %2307 = vmatprep.subr.mxu0 0.0
    %2308 = vmatpush2.msra.mxu0 0.0
    %2309 = vmatprep.subr.mxu0 0.0
    %2310 = vmatpush2.msra.mxu0 0.0
    %2311 = vmatprep.subr.mxu0 0.0
    %2312 = vmatpush2.msra.mxu0 0.0
    %2313 = vmatprep.mubr.f32.mxu0 0.0
    %2314 = vmatmul.mubr.f32.gmra.mxu0 %v2247
    %v2315 = vpop.f32.mrf.mxu0
    %v2316 = vadd.f32 0.0, %v2315
    %v2317 = vpop.f32.mrf.mxu0
    %2318 = vdwg.mxu0
    %v2319 = vpack.c.bf16 %v2236, %v2236
    %v2320 = vpack.c.bf16 %v2316, %v2316
    %v2321 = vld [vmem:[#allocation14] sm:$0xf]
    %v2322 = vld [vmem:[#allocation14 + $0x4] sm:$0xf]
    %v2323 = vld [vmem:[#allocation14 + $0x8] sm:$0xf]
    %v2324 = vld [vmem:[#allocation14 + $0xc] sm:$0xf]
    %v2325 = vld [vmem:[%s12] sm:$0x1]
    %v2327 = vlaneseq
    %v2328 = vshrl.u32 %v2327, 7
    %v2329 = vsub.s32 0, %v2328
    %v2330 = vrot.slane %v2325, %v2329
    %v2334 = vunpack.c.l.b16 %v2319
    %v2335 = vunpack.c.l.b16 %v2320
    %v2336 = vrot.slane %v2335, 7
    %v2337 = vsel %vm349, %v2336, %v2334
    %v2338 = vpack.c.b16 %v2337, %v2337
    %v2343 = vunpack.c.l.b16 %v2321
    %v2344 = vunpack.c.l.b16 %v2322
    %v2345 = vunpack.c.l.b16 %v2323
    %v2346 = vunpack.c.l.b16 %v2324
    %v2347 = vpack.c.b16 %v2344, %v2343
    %v2348 = vpack.c.b16 %v2346, %v2345
    %v2352 = vsel %vm230, %v2338, 0
    %2354 = vmatprep.subr.bf16.mxu0 0
    %2355 = vmatpush1.bf16.msra.mxu0 0
    %2356 = vmatprep.subr.bf16.mxu0 0
    %2357 = vmatpush1.bf16.msra.mxu0 0
    %2358 = vmatprep.subr.bf16.mxu0 0
    %2359 = vmatpush1.bf16.msra.mxu0 0
    %2360 = vmatprep.subr.bf16.mxu0 0
    %2361 = vmatpush1.bf16.msra.mxu0 0
    %2362 = vmatprep.subr.bf16.mxu0 0
    %2363 = vmatpush1.bf16.msra.mxu0 0
    %2364 = vmatprep.subr.bf16.mxu0 0
    %2365 = vmatpush1.bf16.msra.mxu0 0
    %2366 = vmatprep.subr.bf16.mxu0 0
    %2367 = vmatpush1.bf16.msra.mxu0 %v2348
    %2368 = vmatprep.subr.bf16.mxu0 0
    %2369 = vmatpush1.bf16.msra.mxu0 %v2347
    %2370 = vmatprep.subr.bf16.mxu0 0
    %2371 = vmatpush2.bf16.msra.mxu0 0
    %2372 = vmatprep.subr.bf16.mxu0 0
    %2373 = vmatpush2.bf16.msra.mxu0 0
    %2374 = vmatprep.subr.bf16.mxu0 0
    %2375 = vmatpush2.bf16.msra.mxu0 0
    %2376 = vmatprep.subr.bf16.mxu0 0
    %2377 = vmatpush2.bf16.msra.mxu0 0
    %2378 = vmatprep.subr.bf16.mxu0 0
    %2379 = vmatpush2.bf16.msra.mxu0 0
    %2380 = vmatprep.subr.bf16.mxu0 0
    %2381 = vmatpush2.bf16.msra.mxu0 0
    %2382 = vmatprep.subr.bf16.mxu0 0
    %2383 = vmatpush2.bf16.msra.mxu0 0
    %2384 = vmatprep.subr.bf16.mxu0 0
    %2385 = vmatpush2.bf16.msra.mxu0 0
    %2386 = vmatprep.mubr.bf16.mxu0 0
    %2387 = vmatmul.mubr.bf16.gmra.mxu0 %v2352
    %v2388 = vpop.f32.mrf.mxu0
    %v2389 = vadd.f32 %v2330, %v2388
    %v2390 = vpop.f32.mrf.mxu0
    %v2391 = vpop.f32.mrf.mxu0
    %v2392 = vpop.f32.mrf.mxu0
    %2393 = vdwg.mxu0
    %v2394 = vmax.f32 %v2389, 0.0
    %v2395 = vpack.c.bf16 %v2394, %v2394
    %v2396 = vld [vmem:[%s13] sm:$0xf]
    %v2397 = vld [vmem:[%s13 + $0x4] sm:$0xf]
    %v2398 = vld [vmem:[%s13 + $0x8] sm:$0xf]
    %v2399 = vld [vmem:[%s13 + $0xc] sm:$0xf]
    %v2400 = vld [vmem:[#allocation3] sm:$0x1]
    %v2402 = vlaneseq
    %v2403 = vshrl.u32 %v2402, 7
    %v2404 = vsub.s32 0, %v2403
    %v2405 = vrot.slane %v2400, %v2404
    %v2411 = vunpack.c.l.b16 %v2396
    %v2412 = vunpack.c.l.b16 %v2397
    %v2413 = vunpack.c.l.b16 %v2398
    %v2414 = vunpack.c.l.b16 %v2399
    %v2415 = vpack.c.b16 %v2412, %v2411
    %v2416 = vpack.c.b16 %v2414, %v2413
    %v2420 = vsel %vm230, %v2395, 0
    %2422 = vmatprep.subr.bf16.mxu0 0
    %2423 = vmatpush1.bf16.msra.mxu0 0
    %2424 = vmatprep.subr.bf16.mxu0 0
    %2425 = vmatpush1.bf16.msra.mxu0 0
    %2426 = vmatprep.subr.bf16.mxu0 0
    %2427 = vmatpush1.bf16.msra.mxu0 0
    %2428 = vmatprep.subr.bf16.mxu0 0
    %2429 = vmatpush1.bf16.msra.mxu0 0
    %2430 = vmatprep.subr.bf16.mxu0 0
    %2431 = vmatpush1.bf16.msra.mxu0 0
    %2432 = vmatprep.subr.bf16.mxu0 0
    %2433 = vmatpush1.bf16.msra.mxu0 0
    %2434 = vmatprep.subr.bf16.mxu0 0
    %2435 = vmatpush1.bf16.msra.mxu0 %v2416
    %2436 = vmatprep.subr.bf16.mxu0 0
    %2437 = vmatpush1.bf16.msra.mxu0 %v2415
    %2438 = vmatprep.subr.bf16.mxu0 0
    %2439 = vmatpush2.bf16.msra.mxu0 0
    %2440 = vmatprep.subr.bf16.mxu0 0
    %2441 = vmatpush2.bf16.msra.mxu0 0
    %2442 = vmatprep.subr.bf16.mxu0 0
    %2443 = vmatpush2.bf16.msra.mxu0 0
    %2444 = vmatprep.subr.bf16.mxu0 0
    %2445 = vmatpush2.bf16.msra.mxu0 0
    %2446 = vmatprep.subr.bf16.mxu0 0
    %2447 = vmatpush2.bf16.msra.mxu0 0
    %2448 = vmatprep.subr.bf16.mxu0 0
    %2449 = vmatpush2.bf16.msra.mxu0 0
    %2450 = vmatprep.subr.bf16.mxu0 0
    %2451 = vmatpush2.bf16.msra.mxu0 0
    %2452 = vmatprep.subr.bf16.mxu0 0
    %2453 = vmatpush2.bf16.msra.mxu0 0
    %2454 = vmatprep.mubr.bf16.mxu0 0
    %2455 = vmatmul.mubr.bf16.gmra.mxu0 %v2420
    %v2456 = vpop.f32.mrf.mxu0
    %v2457 = vadd.f32 %v2405, %v2456
    %v2458 = vpop.f32.mrf.mxu0
    %v2459 = vpop.f32.mrf.mxu0
    %v2460 = vpop.f32.mrf.mxu0
    %2461 = vdwg.mxu0
    %vm2462 = vcmask 1024
    %2463 = vst.msk [vmem:[%s15] sm:$0x3] %vm2462, %v2457
    // Predicated region
    $region90: #{tpu_custom_call.1} parent=1 // pred_check
      _
    $region91: #{tpu_custom_call.1} parent=1 // pred_check_branch
      %2465 = sbr.rel (0) target = $region93
    $region92: #{tpu_custom_call.1} parent=1 // pred_region
      _
    $region93: #{tpu_custom_call.1} parent=1 // pred_fallthru
      _
    // Predicated region
    $region94: #{tpu_custom_call.1} parent=1 // pred_check
      _
    $region95: #{tpu_custom_call.1} parent=1 // pred_check_branch
      %2467 = sbr.rel (0) target = $region97
    $region96: #{tpu_custom_call.1} parent=1 // pred_region
      _
    $region97: #{tpu_custom_call.1} parent=1 // pred_fallthru
      _
    %2468 = vsyncpa [#allocation5], 1
    %2469 = vsyncpa [#allocation7], 1
    %2470 = vsyncpa [#allocation10], 1
    %2471 = vsyncpa [#allocation13], 1

</llo_original>
